<compile_context>
chip_gen: v5e
topology: v5e:2x2
jax: 0.10.0
libtpu: 0.0.40
codegen_flags: <defaults>
</compile_context>

<pallas_src>
import math

import jax
import jax.numpy as jnp
from jax import lax
from jax.experimental import pallas as pl
from jax.experimental.pallas import tpu as pltpu

BN_EPS = 1e-5


# --------------------------------------------------------------------------- #
# Fused Conv(3x3, as im2col matmul) + bias + BatchNorm(train) + ReLU kernel
# --------------------------------------------------------------------------- #
def _conv_bn_relu_kernel(p_ref, w_ref, b_ref, g_ref, beta_ref, o_ref):
    # p_ref    : (M, K)  im2col patches, M = B*H*W (multiple of 8), K = 9*Cin
    # w_ref    : (K, N)  flattened conv weight, N = Cout (lane dim)
    # b_ref    : (1, N)  conv bias
    # g_ref    : (1, N)  BN gamma
    # beta_ref : (1, N)  BN beta
    # o_ref    : (M, N)  relu(batchnorm(conv(x)))
    y = jnp.dot(p_ref[...], w_ref[...], preferred_element_type=jnp.float32)
    y = y + b_ref[...]

    # Training-mode batch statistics over every (b, h, w) position, per channel.
    mean = jnp.mean(y, axis=0, keepdims=True)                 # (1, N)
    cent = y - mean
    var = jnp.mean(cent * cent, axis=0, keepdims=True)        # biased, as F.batch_norm
    inv = lax.rsqrt(var + BN_EPS)

    yn = cent * (inv * g_ref[...]) + beta_ref[...]
    o_ref[...] = jnp.maximum(yn, 0.0)


def _im2col_3x3_same(x_nhwc):
    """(B, H, W, C) -> (B*H*W, 9*C) patches for a 3x3, pad=1, stride=1 conv."""
    B, H, W, C = x_nhwc.shape
    xp = jnp.pad(x_nhwc, ((0, 0), (1, 1), (1, 1), (0, 0)))
    cols = []
    for dy in range(3):
        for dx in range(3):
            cols.append(xp[:, dy:dy + H, dx:dx + W, :])
    patches = jnp.concatenate(cols, axis=-1)                  # (B, H, W, 9*C)
    return patches.reshape(B * H * W, 9 * C)


def conv_bn_relu_block(x_nhwc, w, b, gamma, beta):
    """One ConvBlock minus the pool: conv3x3(pad=1) -> BN(train) -> ReLU.

    x_nhwc : (B, H, W, Cin)   w : (3, 3, Cin, Cout)   b/gamma/beta : (Cout,)
    returns (B, H, W, Cout)
    """
    B, H, W, Cin = x_nhwc.shape
    Cout = w.shape[-1]

    patches = _im2col_3x3_same(x_nhwc)                        # (M, 9*Cin)
    w_mat = w.reshape(9 * Cin, Cout)                          # (K, N)

    vmem = pl.BlockSpec(memory_space=pltpu.MemorySpace.VMEM)
    out = pl.pallas_call(
        _conv_bn_relu_kernel,
        out_shape=jax.ShapeDtypeStruct((B * H * W, Cout), jnp.float32),
        in_specs=[vmem, vmem, vmem, vmem, vmem],
        out_specs=vmem,
    )(patches, w_mat,
      b.reshape(1, Cout), gamma.reshape(1, Cout), beta.reshape(1, Cout))

    return out.reshape(B, H, W, Cout)


def _maxpool_2x2(x_nhwc):
    """MaxPool2d(2) — pure reshape + max in the wrapper (memory-bound)."""
    B, H, W, C = x_nhwc.shape
    return jnp.max(x_nhwc.reshape(B, H // 2, 2, W // 2, 2, C), axis=(2, 4))


# --------------------------------------------------------------------------- #
# ConvNetS forward
# --------------------------------------------------------------------------- #
def convnet_s_forward(params, x_nchw, depth=4, flatten=True):
    """params: list of (w, b, gamma, beta) per ConvBlock. x_nchw: (B, C, H, W)."""
    out = x_nchw[:, 0:1, :, :]                                # out = x[:, 0:1, :, :]
    out = jnp.transpose(out, (0, 2, 3, 1))                    # NCHW -> NHWC (lane = C)
    for i in range(depth):
        w, b, gamma, beta = params[i]
        out = conv_bn_relu_block(out, w, b, gamma, beta)
        if i < 4:                                             # ConvBlock(pool = i < 4)
            out = _maxpool_2x2(out)
    if flatten:
        out = jnp.transpose(out, (0, 3, 1, 2))                # back to NCHW ordering
        out = out.reshape(out.shape[0], -1)                   # torch .view(B, -1)
    return out


def init_params(key, depth=4):
    """Matches init_layer: conv weight ~ N(0, sqrt(2/(k*k*Cout))), BN gamma=1, beta=0."""
    params = []
    for i in range(depth):
        cin = 1 if i == 0 else 64
        cout = 64
        key, kw, kb = jax.random.split(key, 3)
        std = math.sqrt(2.0 / float(3 * 3 * cout))
        w = jax.random.normal(kw, (3, 3, cin, cout), jnp.float32) * std
        bound = 1.0 / math.sqrt(cin * 9)
        b = jax.random.uniform(kb, (cout,), jnp.float32, -bound, bound)
        gamma = jnp.ones((cout,), jnp.float32)
        beta = jnp.zeros((cout,), jnp.float32)
        params.append((w, b, gamma, beta))
    return params


# --------------------------------------------------------------------------- #
# Pure-XLA reference (independent conv path) for correctness checking
# --------------------------------------------------------------------------- #
def _ref_block(x_nhwc, w, b, gamma, beta):
    y = lax.conv_general_dilated(
        x_nhwc, w, window_strides=(1, 1), padding="SAME",
        dimension_numbers=("NHWC", "HWIO", "NHWC")) + b
    mean = jnp.mean(y, axis=(0, 1, 2), keepdims=True)
    cent = y - mean
    var = jnp.mean(cent * cent, axis=(0, 1, 2), keepdims=True)
    yn = cent * lax.rsqrt(var + BN_EPS) * gamma + beta
    return jnp.maximum(yn, 0.0)


def reference_forward(params, x_nchw, depth=4, flatten=True):
    out = x_nchw[:, 0:1, :, :]
    out = jnp.transpose(out, (0, 2, 3, 1))
    for i in range(depth):
        w, b, gamma, beta = params[i]
        out = _ref_block(out, w, b, gamma, beta)
        if i < 4:
            out = _maxpool_2x2(out)
    if flatten:
        out = jnp.transpose(out, (0, 3, 1, 2))
        out = out.reshape(out.shape[0], -1)
    return out


# --------------------------------------------------------------------------- #
if __name__ == "__main__":
    key = jax.random.PRNGKey(0)
    kx, kp = jax.random.split(key)

    # Small shapes consistent with the module: batch=2, channels=4 (only channel
    # 0 is used), spatial 16x16, depth=4  ->  16 -> 8 -> 4 -> 2 -> 1, feat dim 64.
    x = jax.random.normal(kx, (2, 4, 16, 16), dtype=jnp.float32)
    params = init_params(kp, depth=4)

    fwd = jax.jit(lambda p, xx: convnet_s_forward(p, xx, depth=4, flatten=True))
    out = jax.block_until_ready(fwd(params, x))

    assert out.shape == (2, 64), out.shape
    assert bool(jnp.all(jnp.isfinite(out)))

    ref = jax.block_until_ready(reference_forward(params, x, depth=4, flatten=True))
    max_err = float(jnp.max(jnp.abs(out - ref)))
    assert max_err < 5e-2, f"max abs diff vs XLA reference: {max_err}"

    print("KERNEL_OK")
</pallas_src>

<mosaic_0001>
module attributes {stable_mosaic.version = 11 : i64} {
  func.func @_conv_bn_relu_kernel(%arg0: memref<512x9xf32, #tpu.memory_space<vmem>>, %arg1: memref<9x64xf32, #tpu.memory_space<vmem>>, %arg2: memref<1x64xf32, #tpu.memory_space<vmem>>, %arg3: memref<1x64xf32, #tpu.memory_space<vmem>>, %arg4: memref<1x64xf32, #tpu.memory_space<vmem>>, %arg5: memref<512x64xf32, #tpu.memory_space<vmem>>) attributes {dimension_semantics = [], scalar_prefetch = 0 : i64, scratch_operands = 0 : i64, tpu.core_type = #tpu.core_type<tc>} {
    %c0 = arith.constant 0 : index
    %c0_0 = arith.constant 0 : index
    %0 = vector.load %arg0[%c0, %c0_0] : memref<512x9xf32, #tpu.memory_space<vmem>>, vector<512x9xf32>
    %c0_1 = arith.constant 0 : index
    %c0_2 = arith.constant 0 : index
    %1 = vector.load %arg1[%c0_1, %c0_2] : memref<9x64xf32, #tpu.memory_space<vmem>>, vector<9x64xf32>
    %cst = arith.constant dense<0.000000e+00> : vector<512x64xf32>
    %2 = tpu.matmul %0, %1, %cst {dimension_numbers = #tpu.dot_dimension_numbers<[1], [0], [0], [1], [0, 0, 1, 1], [], []>} : vector<512x9xf32>, vector<9x64xf32>, vector<512x64xf32> -> vector<512x64xf32>
    %c0_3 = arith.constant 0 : index
    %c0_4 = arith.constant 0 : index
    %3 = vector.load %arg2[%c0_3, %c0_4] : memref<1x64xf32, #tpu.memory_space<vmem>>, vector<1x64xf32>
    %4 = vector.broadcast %3 : vector<1x64xf32> to vector<512x64xf32>
    %5 = arith.addf %2, %4 : vector<512x64xf32>
    %cst_5 = arith.constant dense<0.000000e+00> : vector<64xf32>
    %6 = vector.multi_reduction <add>, %5, %cst_5 [0] : vector<512x64xf32> to vector<64xf32>
    %7 = vector.shape_cast %6 : vector<64xf32> to vector<1x64xf32>
    %cst_6 = arith.constant 5.120000e+02 : f32
    %8 = vector.broadcast %cst_6 : f32 to vector<1x64xf32>
    %9 = arith.divf %7, %8 : vector<1x64xf32>
    %10 = vector.broadcast %9 : vector<1x64xf32> to vector<512x64xf32>
    %11 = arith.subf %5, %10 : vector<512x64xf32>
    %12 = arith.mulf %11, %11 : vector<512x64xf32>
    %cst_7 = arith.constant dense<0.000000e+00> : vector<64xf32>
    %13 = vector.multi_reduction <add>, %12, %cst_7 [0] : vector<512x64xf32> to vector<64xf32>
    %14 = vector.shape_cast %13 : vector<64xf32> to vector<1x64xf32>
    %cst_8 = arith.constant 5.120000e+02 : f32
    %15 = vector.broadcast %cst_8 : f32 to vector<1x64xf32>
    %16 = arith.divf %14, %15 : vector<1x64xf32>
    %cst_9 = arith.constant 9.99999974E-6 : f32
    %17 = vector.broadcast %cst_9 : f32 to vector<1x64xf32>
    %18 = arith.addf %16, %17 : vector<1x64xf32>
    %19 = math.rsqrt %18 : vector<1x64xf32>
    %c0_10 = arith.constant 0 : index
    %c0_11 = arith.constant 0 : index
    %20 = vector.load %arg3[%c0_10, %c0_11] : memref<1x64xf32, #tpu.memory_space<vmem>>, vector<1x64xf32>
    %21 = arith.mulf %19, %20 : vector<1x64xf32>
    %22 = vector.broadcast %21 : vector<1x64xf32> to vector<512x64xf32>
    %23 = arith.mulf %11, %22 : vector<512x64xf32>
    %c0_12 = arith.constant 0 : index
    %c0_13 = arith.constant 0 : index
    %24 = vector.load %arg4[%c0_12, %c0_13] : memref<1x64xf32, #tpu.memory_space<vmem>>, vector<1x64xf32>
    %25 = vector.broadcast %24 : vector<1x64xf32> to vector<512x64xf32>
    %26 = arith.addf %23, %25 : vector<512x64xf32>
    %cst_14 = arith.constant 0.000000e+00 : f32
    %27 = vector.broadcast %cst_14 : f32 to vector<512x64xf32>
    %28 = arith.maximumf %26, %27 : vector<512x64xf32>
    %c0_15 = arith.constant 0 : index
    %c0_16 = arith.constant 0 : index
    %29 = vector.load %arg5[%c0_15, %c0_16] : memref<512x64xf32, #tpu.memory_space<vmem>>, vector<512x64xf32>
    tpu.vector_store %arg5[%c0_15, %c0_16], %28 {strides = array<i32>} : memref<512x64xf32, #tpu.memory_space<vmem>>, vector<512x64xf32>,
    return
  }
}

module attributes {stable_mosaic.version = 11 : i64} {
  func.func @_conv_bn_relu_kernel(%arg0: memref<128x576xf32, #tpu.memory_space<vmem>>, %arg1: memref<576x64xf32, #tpu.memory_space<vmem>>, %arg2: memref<1x64xf32, #tpu.memory_space<vmem>>, %arg3: memref<1x64xf32, #tpu.memory_space<vmem>>, %arg4: memref<1x64xf32, #tpu.memory_space<vmem>>, %arg5: memref<128x64xf32, #tpu.memory_space<vmem>>) attributes {dimension_semantics = [], scalar_prefetch = 0 : i64, scratch_operands = 0 : i64, tpu.core_type = #tpu.core_type<tc>} {
    %c0 = arith.constant 0 : index
    %c0_0 = arith.constant 0 : index
    %0 = vector.load %arg0[%c0, %c0_0] : memref<128x576xf32, #tpu.memory_space<vmem>>, vector<128x576xf32>
    %c0_1 = arith.constant 0 : index
    %c0_2 = arith.constant 0 : index
    %1 = vector.load %arg1[%c0_1, %c0_2] : memref<576x64xf32, #tpu.memory_space<vmem>>, vector<576x64xf32>
    %cst = arith.constant dense<0.000000e+00> : vector<128x64xf32>
    %2 = tpu.matmul %0, %1, %cst {dimension_numbers = #tpu.dot_dimension_numbers<[1], [0], [0], [1], [0, 0, 1, 1], [], []>} : vector<128x576xf32>, vector<576x64xf32>, vector<128x64xf32> -> vector<128x64xf32>
    %c0_3 = arith.constant 0 : index
    %c0_4 = arith.constant 0 : index
    %3 = vector.load %arg2[%c0_3, %c0_4] : memref<1x64xf32, #tpu.memory_space<vmem>>, vector<1x64xf32>
    %4 = vector.broadcast %3 : vector<1x64xf32> to vector<128x64xf32>
    %5 = arith.addf %2, %4 : vector<128x64xf32>
    %cst_5 = arith.constant dense<0.000000e+00> : vector<64xf32>
    %6 = vector.multi_reduction <add>, %5, %cst_5 [0] : vector<128x64xf32> to vector<64xf32>
    %7 = vector.shape_cast %6 : vector<64xf32> to vector<1x64xf32>
    %cst_6 = arith.constant 1.280000e+02 : f32
    %8 = vector.broadcast %cst_6 : f32 to vector<1x64xf32>
    %9 = arith.divf %7, %8 : vector<1x64xf32>
    %10 = vector.broadcast %9 : vector<1x64xf32> to vector<128x64xf32>
    %11 = arith.subf %5, %10 : vector<128x64xf32>
    %12 = arith.mulf %11, %11 : vector<128x64xf32>
    %cst_7 = arith.constant dense<0.000000e+00> : vector<64xf32>
    %13 = vector.multi_reduction <add>, %12, %cst_7 [0] : vector<128x64xf32> to vector<64xf32>
    %14 = vector.shape_cast %13 : vector<64xf32> to vector<1x64xf32>
    %cst_8 = arith.constant 1.280000e+02 : f32
    %15 = vector.broadcast %cst_8 : f32 to vector<1x64xf32>
    %16 = arith.divf %14, %15 : vector<1x64xf32>
    %cst_9 = arith.constant 9.99999974E-6 : f32
    %17 = vector.broadcast %cst_9 : f32 to vector<1x64xf32>
    %18 = arith.addf %16, %17 : vector<1x64xf32>
    %19 = math.rsqrt %18 : vector<1x64xf32>
    %c0_10 = arith.constant 0 : index
    %c0_11 = arith.constant 0 : index
    %20 = vector.load %arg3[%c0_10, %c0_11] : memref<1x64xf32, #tpu.memory_space<vmem>>, vector<1x64xf32>
    %21 = arith.mulf %19, %20 : vector<1x64xf32>
    %22 = vector.broadcast %21 : vector<1x64xf32> to vector<128x64xf32>
    %23 = arith.mulf %11, %22 : vector<128x64xf32>
    %c0_12 = arith.constant 0 : index
    %c0_13 = arith.constant 0 : index
    %24 = vector.load %arg4[%c0_12, %c0_13] : memref<1x64xf32, #tpu.memory_space<vmem>>, vector<1x64xf32>
    %25 = vector.broadcast %24 : vector<1x64xf32> to vector<128x64xf32>
    %26 = arith.addf %23, %25 : vector<128x64xf32>
    %cst_14 = arith.constant 0.000000e+00 : f32
    %27 = vector.broadcast %cst_14 : f32 to vector<128x64xf32>
    %28 = arith.maximumf %26, %27 : vector<128x64xf32>
    %c0_15 = arith.constant 0 : index
    %c0_16 = arith.constant 0 : index
    %29 = vector.load %arg5[%c0_15, %c0_16] : memref<128x64xf32, #tpu.memory_space<vmem>>, vector<128x64xf32>
    tpu.vector_store %arg5[%c0_15, %c0_16], %28 {strides = array<i32>} : memref<128x64xf32, #tpu.memory_space<vmem>>, vector<128x64xf32>,
    return
  }
}

module attributes {stable_mosaic.version = 11 : i64} {
  func.func @_conv_bn_relu_kernel(%arg0: memref<32x576xf32, #tpu.memory_space<vmem>>, %arg1: memref<576x64xf32, #tpu.memory_space<vmem>>, %arg2: memref<1x64xf32, #tpu.memory_space<vmem>>, %arg3: memref<1x64xf32, #tpu.memory_space<vmem>>, %arg4: memref<1x64xf32, #tpu.memory_space<vmem>>, %arg5: memref<32x64xf32, #tpu.memory_space<vmem>>) attributes {dimension_semantics = [], scalar_prefetch = 0 : i64, scratch_operands = 0 : i64, tpu.core_type = #tpu.core_type<tc>} {
    %c0 = arith.constant 0 : index
    %c0_0 = arith.constant 0 : index
    %0 = vector.load %arg0[%c0, %c0_0] : memref<32x576xf32, #tpu.memory_space<vmem>>, vector<32x576xf32>
    %c0_1 = arith.constant 0 : index
    %c0_2 = arith.constant 0 : index
    %1 = vector.load %arg1[%c0_1, %c0_2] : memref<576x64xf32, #tpu.memory_space<vmem>>, vector<576x64xf32>
    %cst = arith.constant dense<0.000000e+00> : vector<32x64xf32>
    %2 = tpu.matmul %0, %1, %cst {dimension_numbers = #tpu.dot_dimension_numbers<[1], [0], [0], [1], [0, 0, 1, 1], [], []>} : vector<32x576xf32>, vector<576x64xf32>, vector<32x64xf32> -> vector<32x64xf32>
    %c0_3 = arith.constant 0 : index
    %c0_4 = arith.constant 0 : index
    %3 = vector.load %arg2[%c0_3, %c0_4] : memref<1x64xf32, #tpu.memory_space<vmem>>, vector<1x64xf32>
    %4 = vector.broadcast %3 : vector<1x64xf32> to vector<32x64xf32>
    %5 = arith.addf %2, %4 : vector<32x64xf32>
    %cst_5 = arith.constant dense<0.000000e+00> : vector<64xf32>
    %6 = vector.multi_reduction <add>, %5, %cst_5 [0] : vector<32x64xf32> to vector<64xf32>
    %7 = vector.shape_cast %6 : vector<64xf32> to vector<1x64xf32>
    %cst_6 = arith.constant 3.200000e+01 : f32
    %8 = vector.broadcast %cst_6 : f32 to vector<1x64xf32>
    %9 = arith.divf %7, %8 : vector<1x64xf32>
    %10 = vector.broadcast %9 : vector<1x64xf32> to vector<32x64xf32>
    %11 = arith.subf %5, %10 : vector<32x64xf32>
    %12 = arith.mulf %11, %11 : vector<32x64xf32>
    %cst_7 = arith.constant dense<0.000000e+00> : vector<64xf32>
    %13 = vector.multi_reduction <add>, %12, %cst_7 [0] : vector<32x64xf32> to vector<64xf32>
    %14 = vector.shape_cast %13 : vector<64xf32> to vector<1x64xf32>
    %cst_8 = arith.constant 3.200000e+01 : f32
    %15 = vector.broadcast %cst_8 : f32 to vector<1x64xf32>
    %16 = arith.divf %14, %15 : vector<1x64xf32>
    %cst_9 = arith.constant 9.99999974E-6 : f32
    %17 = vector.broadcast %cst_9 : f32 to vector<1x64xf32>
    %18 = arith.addf %16, %17 : vector<1x64xf32>
    %19 = math.rsqrt %18 : vector<1x64xf32>
    %c0_10 = arith.constant 0 : index
    %c0_11 = arith.constant 0 : index
    %20 = vector.load %arg3[%c0_10, %c0_11] : memref<1x64xf32, #tpu.memory_space<vmem>>, vector<1x64xf32>
    %21 = arith.mulf %19, %20 : vector<1x64xf32>
    %22 = vector.broadcast %21 : vector<1x64xf32> to vector<32x64xf32>
    %23 = arith.mulf %11, %22 : vector<32x64xf32>
    %c0_12 = arith.constant 0 : index
    %c0_13 = arith.constant 0 : index
    %24 = vector.load %arg4[%c0_12, %c0_13] : memref<1x64xf32, #tpu.memory_space<vmem>>, vector<1x64xf32>
    %25 = vector.broadcast %24 : vector<1x64xf32> to vector<32x64xf32>
    %26 = arith.addf %23, %25 : vector<32x64xf32>
    %cst_14 = arith.constant 0.000000e+00 : f32
    %27 = vector.broadcast %cst_14 : f32 to vector<32x64xf32>
    %28 = arith.maximumf %26, %27 : vector<32x64xf32>
    %c0_15 = arith.constant 0 : index
    %c0_16 = arith.constant 0 : index
    %29 = vector.load %arg5[%c0_15, %c0_16] : memref<32x64xf32, #tpu.memory_space<vmem>>, vector<32x64xf32>
    tpu.vector_store %arg5[%c0_15, %c0_16], %28 {strides = array<i32>} : memref<32x64xf32, #tpu.memory_space<vmem>>, vector<32x64xf32>,
    return
  }
}

module attributes {stable_mosaic.version = 11 : i64} {
  func.func @_conv_bn_relu_kernel(%arg0: memref<8x576xf32, #tpu.memory_space<vmem>>, %arg1: memref<576x64xf32, #tpu.memory_space<vmem>>, %arg2: memref<1x64xf32, #tpu.memory_space<vmem>>, %arg3: memref<1x64xf32, #tpu.memory_space<vmem>>, %arg4: memref<1x64xf32, #tpu.memory_space<vmem>>, %arg5: memref<8x64xf32, #tpu.memory_space<vmem>>) attributes {dimension_semantics = [], scalar_prefetch = 0 : i64, scratch_operands = 0 : i64, tpu.core_type = #tpu.core_type<tc>} {
    %c0 = arith.constant 0 : index
    %c0_0 = arith.constant 0 : index
    %0 = vector.load %arg0[%c0, %c0_0] : memref<8x576xf32, #tpu.memory_space<vmem>>, vector<8x576xf32>
    %c0_1 = arith.constant 0 : index
    %c0_2 = arith.constant 0 : index
    %1 = vector.load %arg1[%c0_1, %c0_2] : memref<576x64xf32, #tpu.memory_space<vmem>>, vector<576x64xf32>
    %cst = arith.constant dense<0.000000e+00> : vector<8x64xf32>
    %2 = tpu.matmul %0, %1, %cst {dimension_numbers = #tpu.dot_dimension_numbers<[1], [0], [0], [1], [0, 0, 1, 1], [], []>} : vector<8x576xf32>, vector<576x64xf32>, vector<8x64xf32> -> vector<8x64xf32>
    %c0_3 = arith.constant 0 : index
    %c0_4 = arith.constant 0 : index
    %3 = vector.load %arg2[%c0_3, %c0_4] : memref<1x64xf32, #tpu.memory_space<vmem>>, vector<1x64xf32>
    %4 = vector.broadcast %3 : vector<1x64xf32> to vector<8x64xf32>
    %5 = arith.addf %2, %4 : vector<8x64xf32>
    %cst_5 = arith.constant dense<0.000000e+00> : vector<64xf32>
    %6 = vector.multi_reduction <add>, %5, %cst_5 [0] : vector<8x64xf32> to vector<64xf32>
    %7 = vector.shape_cast %6 : vector<64xf32> to vector<1x64xf32>
    %cst_6 = arith.constant 8.000000e+00 : f32
    %8 = vector.broadcast %cst_6 : f32 to vector<1x64xf32>
    %9 = arith.divf %7, %8 : vector<1x64xf32>
    %10 = vector.broadcast %9 : vector<1x64xf32> to vector<8x64xf32>
    %11 = arith.subf %5, %10 : vector<8x64xf32>
    %12 = arith.mulf %11, %11 : vector<8x64xf32>
    %cst_7 = arith.constant dense<0.000000e+00> : vector<64xf32>
    %13 = vector.multi_reduction <add>, %12, %cst_7 [0] : vector<8x64xf32> to vector<64xf32>
    %14 = vector.shape_cast %13 : vector<64xf32> to vector<1x64xf32>
    %cst_8 = arith.constant 8.000000e+00 : f32
    %15 = vector.broadcast %cst_8 : f32 to vector<1x64xf32>
    %16 = arith.divf %14, %15 : vector<1x64xf32>
    %cst_9 = arith.constant 9.99999974E-6 : f32
    %17 = vector.broadcast %cst_9 : f32 to vector<1x64xf32>
    %18 = arith.addf %16, %17 : vector<1x64xf32>
    %19 = math.rsqrt %18 : vector<1x64xf32>
    %c0_10 = arith.constant 0 : index
    %c0_11 = arith.constant 0 : index
    %20 = vector.load %arg3[%c0_10, %c0_11] : memref<1x64xf32, #tpu.memory_space<vmem>>, vector<1x64xf32>
    %21 = arith.mulf %19, %20 : vector<1x64xf32>
    %22 = vector.broadcast %21 : vector<1x64xf32> to vector<8x64xf32>
    %23 = arith.mulf %11, %22 : vector<8x64xf32>
    %c0_12 = arith.constant 0 : index
    %c0_13 = arith.constant 0 : index
    %24 = vector.load %arg4[%c0_12, %c0_13] : memref<1x64xf32, #tpu.memory_space<vmem>>, vector<1x64xf32>
    %25 = vector.broadcast %24 : vector<1x64xf32> to vector<8x64xf32>
    %26 = arith.addf %23, %25 : vector<8x64xf32>
    %cst_14 = arith.constant 0.000000e+00 : f32
    %27 = vector.broadcast %cst_14 : f32 to vector<8x64xf32>
    %28 = arith.maximumf %26, %27 : vector<8x64xf32>
    %c0_15 = arith.constant 0 : index
    %c0_16 = arith.constant 0 : index
    %29 = vector.load %arg5[%c0_15, %c0_16] : memref<8x64xf32, #tpu.memory_space<vmem>>, vector<8x64xf32>
    tpu.vector_store %arg5[%c0_15, %c0_16], %28 {strides = array<i32>} : memref<8x64xf32, #tpu.memory_space<vmem>>, vector<8x64xf32>,
    return
  }
}

</mosaic_0001>

<llo_original>
// kernel: _lambda_.4
$region0: #{_lambda_.4}
  #allocation0 [shape = 'u32[]', space=smem, size = 0x4, offset = 0x4, fixed_abs, tag = 'smem constant byte address 0x4 - core index']
  #allocation1 [shape = 'u32[72,128]{1,0:T(1,128)}', space=vmem, size = 0x9000, scoped, tag = 'internal scratch']
  %s0 = inlined_call_operand.vmem [shape: f32[512,9], index: 0, kind: input, shape index: {}]
  %s1 = inlined_call_operand.vmem [shape: f32[9,64], index: 1, kind: input, shape index: {}]
  %s2 = inlined_call_operand.vmem [shape: f32[1,64], index: 2, kind: input, shape index: {}]
  %s3 = inlined_call_operand.vmem [shape: f32[1,64], index: 3, kind: input, shape index: {}]
  %s4 = inlined_call_operand.vmem [shape: f32[1,64], index: 4, kind: input, shape index: {}]
  %s5 = inlined_call_operand.vmem [shape: f32[512,64], index: 5, kind: output, shape index: {}]
  %s6 = sld [smem:[#allocation0]]
  $region30: #{_lambda_.4} parent=0
    _
  %s8 = ssub.s32 1, %s6
  %s9 = scalar_select 0, %s8, %s6
  // Predicated region
  $region2: #{_lambda_.4} parent=0 // pred_check
    _
  $region3: #{_lambda_.4} parent=0 // pred_check_branch
    %11 = sbr.rel (0) target = $region5
  $region4: #{_lambda_.4} parent=0 // pred_region
    _
  $region5: #{_lambda_.4} parent=0 // pred_fallthru
    _
  // Predicated region
  $region6: #{_lambda_.4} parent=0 // pred_check
    _
  $region7: #{_lambda_.4} parent=0 // pred_check_branch
    %13 = sbr.rel (0) target = $region9
  $region8: #{_lambda_.4} parent=0 // pred_region
    _
  $region9: #{_lambda_.4} parent=0 // pred_fallthru
    _
  // Predicated region
  $region10: #{_lambda_.4} parent=0 // pred_check
    _
  $region11: #{_lambda_.4} parent=0 // pred_check_branch
    %15 = sbr.rel (0) target = $region13
  $region12: #{_lambda_.4} parent=0 // pred_region
    _
  $region13: #{_lambda_.4} parent=0 // pred_fallthru
    _
  // Predicated region
  $region14: #{_lambda_.4} parent=0 // pred_check
    _
  $region15: #{_lambda_.4} parent=0 // pred_check_branch
    %17 = sbr.rel (0) target = $region17
  $region16: #{_lambda_.4} parent=0 // pred_region
    _
  $region17: #{_lambda_.4} parent=0 // pred_fallthru
    _
  // Predicated region
  $region18: #{_lambda_.4} parent=0 // pred_check
    _
  $region19: #{_lambda_.4} parent=0 // pred_check_branch
    %19 = sbr.rel (0) target = $region21
  $region20: #{_lambda_.4} parent=0 // pred_region
    _
  $region21: #{_lambda_.4} parent=0 // pred_fallthru
    _
  %v20 = vld [vmem:[%s0] sm:$0xff]
  %v21 = vld [vmem:[%s0 + $0x8] sm:$0xff]
  %v22 = vld [vmem:[%s0 + $0x10] sm:$0xff]
  %v23 = vld [vmem:[%s0 + $0x18] sm:$0xff]
  %v24 = vld [vmem:[%s0 + $0x20] sm:$0xff]
  %v25 = vld [vmem:[%s0 + $0x28] sm:$0xff]
  %v26 = vld [vmem:[%s0 + $0x30] sm:$0xff]
  %v27 = vld [vmem:[%s0 + $0x38] sm:$0xff]
  %v28 = vld [vmem:[%s0 + $0x40] sm:$0xff]
  %v29 = vld [vmem:[%s0 + $0x48] sm:$0xff]
  %v30 = vld [vmem:[%s0 + $0x50] sm:$0xff]
  %v31 = vld [vmem:[%s0 + $0x58] sm:$0xff]
  %v32 = vld [vmem:[%s0 + $0x60] sm:$0xff]
  %v33 = vld [vmem:[%s0 + $0x68] sm:$0xff]
  %v34 = vld [vmem:[%s0 + $0x70] sm:$0xff]
  %v35 = vld [vmem:[%s0 + $0x78] sm:$0xff]
  %v36 = vld [vmem:[%s0 + $0x80] sm:$0xff]
  %v37 = vld [vmem:[%s0 + $0x88] sm:$0xff]
  %v38 = vld [vmem:[%s0 + $0x90] sm:$0xff]
  %v39 = vld [vmem:[%s0 + $0x98] sm:$0xff]
  %v40 = vld [vmem:[%s0 + $0xa0] sm:$0xff]
  %v41 = vld [vmem:[%s0 + $0xa8] sm:$0xff]
  %v42 = vld [vmem:[%s0 + $0xb0] sm:$0xff]
  %v43 = vld [vmem:[%s0 + $0xb8] sm:$0xff]
  %v44 = vld [vmem:[%s0 + $0xc0] sm:$0xff]
  %v45 = vld [vmem:[%s0 + $0xc8] sm:$0xff]
  %v46 = vld [vmem:[%s0 + $0xd0] sm:$0xff]
  %v47 = vld [vmem:[%s0 + $0xd8] sm:$0xff]
  %v48 = vld [vmem:[%s0 + $0xe0] sm:$0xff]
  %v49 = vld [vmem:[%s0 + $0xe8] sm:$0xff]
  %v50 = vld [vmem:[%s0 + $0xf0] sm:$0xff]
  %v51 = vld [vmem:[%s0 + $0xf8] sm:$0xff]
  %v52 = vld [vmem:[%s0 + $0x100] sm:$0xff]
  %v53 = vld [vmem:[%s0 + $0x108] sm:$0xff]
  %v54 = vld [vmem:[%s0 + $0x110] sm:$0xff]
  %v55 = vld [vmem:[%s0 + $0x118] sm:$0xff]
  %v56 = vld [vmem:[%s0 + $0x120] sm:$0xff]
  %v57 = vld [vmem:[%s0 + $0x128] sm:$0xff]
  %v58 = vld [vmem:[%s0 + $0x130] sm:$0xff]
  %v59 = vld [vmem:[%s0 + $0x138] sm:$0xff]
  %v60 = vld [vmem:[%s0 + $0x140] sm:$0xff]
  %v61 = vld [vmem:[%s0 + $0x148] sm:$0xff]
  %v62 = vld [vmem:[%s0 + $0x150] sm:$0xff]
  %v63 = vld [vmem:[%s0 + $0x158] sm:$0xff]
  %v64 = vld [vmem:[%s0 + $0x160] sm:$0xff]
  %v65 = vld [vmem:[%s0 + $0x168] sm:$0xff]
  %v66 = vld [vmem:[%s0 + $0x170] sm:$0xff]
  %v67 = vld [vmem:[%s0 + $0x178] sm:$0xff]
  %v68 = vld [vmem:[%s0 + $0x180] sm:$0xff]
  %v69 = vld [vmem:[%s0 + $0x188] sm:$0xff]
  %v70 = vld [vmem:[%s0 + $0x190] sm:$0xff]
  %v71 = vld [vmem:[%s0 + $0x198] sm:$0xff]
  %v72 = vld [vmem:[%s0 + $0x1a0] sm:$0xff]
  %v73 = vld [vmem:[%s0 + $0x1a8] sm:$0xff]
  %v74 = vld [vmem:[%s0 + $0x1b0] sm:$0xff]
  %v75 = vld [vmem:[%s0 + $0x1b8] sm:$0xff]
  %v76 = vld [vmem:[%s0 + $0x1c0] sm:$0xff]
  %v77 = vld [vmem:[%s0 + $0x1c8] sm:$0xff]
  %v78 = vld [vmem:[%s0 + $0x1d0] sm:$0xff]
  %v79 = vld [vmem:[%s0 + $0x1d8] sm:$0xff]
  %v80 = vld [vmem:[%s0 + $0x1e0] sm:$0xff]
  %v81 = vld [vmem:[%s0 + $0x1e8] sm:$0xff]
  %v82 = vld [vmem:[%s0 + $0x1f0] sm:$0xff]
  %v83 = vld [vmem:[%s0 + $0x1f8] sm:$0xff]
  %v84 = vld [vmem:[%s1] sm:$0xff]
  %v85 = vld [vmem:[%s1 + $0x8] sm:$0x1]
  %v86 = vld [vmem:[%s2] sm:$0x1]
  %v88 = vperm.slane %v86, 0
  %vm90 = vcmask 72704
  %v92 = vsel %vm90, %v20, 0
  %v95 = vsel %vm90, %v21, 0
  %v98 = vsel %vm90, %v22, 0
  %v101 = vsel %vm90, %v23, 0
  %v104 = vsel %vm90, %v24, 0
  %v107 = vsel %vm90, %v25, 0
  %v110 = vsel %vm90, %v26, 0
  %v113 = vsel %vm90, %v27, 0
  %v116 = vsel %vm90, %v28, 0
  %v119 = vsel %vm90, %v29, 0
  %v122 = vsel %vm90, %v30, 0
  %v125 = vsel %vm90, %v31, 0
  %v128 = vsel %vm90, %v32, 0
  %v131 = vsel %vm90, %v33, 0
  %v134 = vsel %vm90, %v34, 0
  %v137 = vsel %vm90, %v35, 0
  %v140 = vsel %vm90, %v36, 0
  %v143 = vsel %vm90, %v37, 0
  %v146 = vsel %vm90, %v38, 0
  %v149 = vsel %vm90, %v39, 0
  %v152 = vsel %vm90, %v40, 0
  %v155 = vsel %vm90, %v41, 0
  %v158 = vsel %vm90, %v42, 0
  %v161 = vsel %vm90, %v43, 0
  %v164 = vsel %vm90, %v44, 0
  %v167 = vsel %vm90, %v45, 0
  %v170 = vsel %vm90, %v46, 0
  %v173 = vsel %vm90, %v47, 0
  %v176 = vsel %vm90, %v48, 0
  %v179 = vsel %vm90, %v49, 0
  %v182 = vsel %vm90, %v50, 0
  %v185 = vsel %vm90, %v51, 0
  %v188 = vsel %vm90, %v52, 0
  %v191 = vsel %vm90, %v53, 0
  %v194 = vsel %vm90, %v54, 0
  %v197 = vsel %vm90, %v55, 0
  %v200 = vsel %vm90, %v56, 0
  %v203 = vsel %vm90, %v57, 0
  %v206 = vsel %vm90, %v58, 0
  %v209 = vsel %vm90, %v59, 0
  %v212 = vsel %vm90, %v60, 0
  %v215 = vsel %vm90, %v61, 0
  %v218 = vsel %vm90, %v62, 0
  %v221 = vsel %vm90, %v63, 0
  %v224 = vsel %vm90, %v64, 0
  %v227 = vsel %vm90, %v65, 0
  %v230 = vsel %vm90, %v66, 0
  %v233 = vsel %vm90, %v67, 0
  %v236 = vsel %vm90, %v68, 0
  %v239 = vsel %vm90, %v69, 0
  %v242 = vsel %vm90, %v70, 0
  %v245 = vsel %vm90, %v71, 0
  %v248 = vsel %vm90, %v72, 0
  %v251 = vsel %vm90, %v73, 0
  %v254 = vsel %vm90, %v74, 0
  %v257 = vsel %vm90, %v75, 0
  %v260 = vsel %vm90, %v76, 0
  %v263 = vsel %vm90, %v77, 0
  %v266 = vsel %vm90, %v78, 0
  %v269 = vsel %vm90, %v79, 0
  %v272 = vsel %vm90, %v80, 0
  %v275 = vsel %vm90, %v81, 0
  %v278 = vsel %vm90, %v82, 0
  %v281 = vsel %vm90, %v83, 0
  %vm283 = vcmask 1040384
  %v285 = vsel %vm283, %v85, 0
  %287 = vmatpush.msra.mxu0 0.0
  %288 = vmatpush.msra.mxu0 0.0
  %289 = vmatpush.msra.mxu0 0.0
  %290 = vmatpush.msra.mxu0 0.0
  %291 = vmatpush.msra.mxu0 0.0
  %292 = vmatpush.msra.mxu0 0.0
  %293 = vmatpush.msra.mxu0 0.0
  %294 = vmatpush.msra.mxu0 0.0
  %295 = vmatpush.msra.mxu0 0.0
  %296 = vmatpush.msra.mxu0 0.0
  %297 = vmatpush.msra.mxu0 0.0
  %298 = vmatpush.msra.mxu0 0.0
  %299 = vmatpush.msra.mxu0 0.0
  %300 = vmatpush.msra.mxu0 0.0
  %301 = vmatpush.msra.mxu0 %v285
  %302 = vmatpush.msra.mxu0 %v84
  %303 = vmatmul.f32.gmra.mxu0 %v92
  %v304 = vpop.f32.mrf.mxu0
  %v305 = vadd.f32 %v88, %v304
  %306 = vmatmul.f32.gmra.mxu0 %v95
  %v307 = vpop.f32.mrf.mxu0
  %v308 = vadd.f32 %v88, %v307
  %309 = vmatmul.f32.gmra.mxu0 %v98
  %v310 = vpop.f32.mrf.mxu0
  %v311 = vadd.f32 %v88, %v310
  %312 = vmatmul.f32.gmra.mxu0 %v101
  %v313 = vpop.f32.mrf.mxu0
  %v314 = vadd.f32 %v88, %v313
  %315 = vmatmul.f32.gmra.mxu0 %v104
  %v316 = vpop.f32.mrf.mxu0
  %v317 = vadd.f32 %v88, %v316
  %318 = vmatmul.f32.gmra.mxu0 %v107
  %v319 = vpop.f32.mrf.mxu0
  %v320 = vadd.f32 %v88, %v319
  %321 = vmatmul.f32.gmra.mxu0 %v110
  %v322 = vpop.f32.mrf.mxu0
  %v323 = vadd.f32 %v88, %v322
  %324 = vmatmul.f32.gmra.mxu0 %v113
  %v325 = vpop.f32.mrf.mxu0
  %v326 = vadd.f32 %v88, %v325
  %327 = vmatmul.f32.gmra.mxu0 %v116
  %v328 = vpop.f32.mrf.mxu0
  %v329 = vadd.f32 %v88, %v328
  %330 = vmatmul.f32.gmra.mxu0 %v119
  %v331 = vpop.f32.mrf.mxu0
  %v332 = vadd.f32 %v88, %v331
  %333 = vmatmul.f32.gmra.mxu0 %v122
  %v334 = vpop.f32.mrf.mxu0
  %v335 = vadd.f32 %v88, %v334
  %336 = vmatmul.f32.gmra.mxu0 %v125
  %v337 = vpop.f32.mrf.mxu0
  %v338 = vadd.f32 %v88, %v337
  %339 = vmatmul.f32.gmra.mxu0 %v128
  %v340 = vpop.f32.mrf.mxu0
  %v341 = vadd.f32 %v88, %v340
  %342 = vmatmul.f32.gmra.mxu0 %v131
  %v343 = vpop.f32.mrf.mxu0
  %v344 = vadd.f32 %v88, %v343
  %345 = vmatmul.f32.gmra.mxu0 %v134
  %v346 = vpop.f32.mrf.mxu0
  %v347 = vadd.f32 %v88, %v346
  %348 = vmatmul.f32.gmra.mxu0 %v137
  %v349 = vpop.f32.mrf.mxu0
  %v350 = vadd.f32 %v88, %v349
  %351 = vmatmul.f32.gmra.mxu0 %v140
  %v352 = vpop.f32.mrf.mxu0
  %v353 = vadd.f32 %v88, %v352
  %354 = vmatmul.f32.gmra.mxu0 %v143
  %v355 = vpop.f32.mrf.mxu0
  %v356 = vadd.f32 %v88, %v355
  %357 = vmatmul.f32.gmra.mxu0 %v146
  %v358 = vpop.f32.mrf.mxu0
  %v359 = vadd.f32 %v88, %v358
  %360 = vmatmul.f32.gmra.mxu0 %v149
  %v361 = vpop.f32.mrf.mxu0
  %v362 = vadd.f32 %v88, %v361
  %363 = vmatmul.f32.gmra.mxu0 %v152
  %v364 = vpop.f32.mrf.mxu0
  %v365 = vadd.f32 %v88, %v364
  %366 = vmatmul.f32.gmra.mxu0 %v155
  %v367 = vpop.f32.mrf.mxu0
  %v368 = vadd.f32 %v88, %v367
  %369 = vmatmul.f32.gmra.mxu0 %v158
  %v370 = vpop.f32.mrf.mxu0
  %v371 = vadd.f32 %v88, %v370
  %372 = vmatmul.f32.gmra.mxu0 %v161
  %v373 = vpop.f32.mrf.mxu0
  %v374 = vadd.f32 %v88, %v373
  %375 = vmatmul.f32.gmra.mxu0 %v164
  %v376 = vpop.f32.mrf.mxu0
  %v377 = vadd.f32 %v88, %v376
  %378 = vmatmul.f32.gmra.mxu0 %v167
  %v379 = vpop.f32.mrf.mxu0
  %v380 = vadd.f32 %v88, %v379
  %381 = vmatmul.f32.gmra.mxu0 %v170
  %v382 = vpop.f32.mrf.mxu0
  %v383 = vadd.f32 %v88, %v382
  %384 = vmatmul.f32.gmra.mxu0 %v173
  %v385 = vpop.f32.mrf.mxu0
  %v386 = vadd.f32 %v88, %v385
  %387 = vmatmul.f32.gmra.mxu0 %v176
  %v388 = vpop.f32.mrf.mxu0
  %v389 = vadd.f32 %v88, %v388
  %390 = vmatmul.f32.gmra.mxu0 %v179
  %v391 = vpop.f32.mrf.mxu0
  %v392 = vadd.f32 %v88, %v391
  %393 = vmatmul.f32.gmra.mxu0 %v182
  %v394 = vpop.f32.mrf.mxu0
  %v395 = vadd.f32 %v88, %v394
  %396 = vmatmul.f32.gmra.mxu0 %v185
  %v397 = vpop.f32.mrf.mxu0
  %v398 = vadd.f32 %v88, %v397
  %399 = vmatmul.f32.gmra.mxu0 %v188
  %v400 = vpop.f32.mrf.mxu0
  %v401 = vadd.f32 %v88, %v400
  %402 = vmatmul.f32.gmra.mxu0 %v191
  %v403 = vpop.f32.mrf.mxu0
  %v404 = vadd.f32 %v88, %v403
  %405 = vmatmul.f32.gmra.mxu0 %v194
  %v406 = vpop.f32.mrf.mxu0
  %v407 = vadd.f32 %v88, %v406
  %408 = vmatmul.f32.gmra.mxu0 %v197
  %v409 = vpop.f32.mrf.mxu0
  %v410 = vadd.f32 %v88, %v409
  %411 = vmatmul.f32.gmra.mxu0 %v200
  %v412 = vpop.f32.mrf.mxu0
  %v413 = vadd.f32 %v88, %v412
  %414 = vmatmul.f32.gmra.mxu0 %v203
  %v415 = vpop.f32.mrf.mxu0
  %v416 = vadd.f32 %v88, %v415
  %417 = vmatmul.f32.gmra.mxu0 %v206
  %v418 = vpop.f32.mrf.mxu0
  %v419 = vadd.f32 %v88, %v418
  %420 = vmatmul.f32.gmra.mxu0 %v209
  %v421 = vpop.f32.mrf.mxu0
  %v422 = vadd.f32 %v88, %v421
  %423 = vmatmul.f32.gmra.mxu0 %v212
  %v424 = vpop.f32.mrf.mxu0
  %v425 = vadd.f32 %v88, %v424
  %426 = vmatmul.f32.gmra.mxu0 %v215
  %v427 = vpop.f32.mrf.mxu0
  %v428 = vadd.f32 %v88, %v427
  %429 = vmatmul.f32.gmra.mxu0 %v218
  %v430 = vpop.f32.mrf.mxu0
  %v431 = vadd.f32 %v88, %v430
  %432 = vmatmul.f32.gmra.mxu0 %v221
  %v433 = vpop.f32.mrf.mxu0
  %v434 = vadd.f32 %v88, %v433
  %435 = vmatmul.f32.gmra.mxu0 %v224
  %v436 = vpop.f32.mrf.mxu0
  %v437 = vadd.f32 %v88, %v436
  %438 = vmatmul.f32.gmra.mxu0 %v227
  %v439 = vpop.f32.mrf.mxu0
  %v440 = vadd.f32 %v88, %v439
  %441 = vmatmul.f32.gmra.mxu0 %v230
  %v442 = vpop.f32.mrf.mxu0
  %v443 = vadd.f32 %v88, %v442
  %444 = vmatmul.f32.gmra.mxu0 %v233
  %v445 = vpop.f32.mrf.mxu0
  %v446 = vadd.f32 %v88, %v445
  %447 = vmatmul.f32.gmra.mxu0 %v236
  %v448 = vpop.f32.mrf.mxu0
  %v449 = vadd.f32 %v88, %v448
  %450 = vmatmul.f32.gmra.mxu0 %v239
  %v451 = vpop.f32.mrf.mxu0
  %v452 = vadd.f32 %v88, %v451
  %453 = vmatmul.f32.gmra.mxu0 %v242
  %v454 = vpop.f32.mrf.mxu0
  %v455 = vadd.f32 %v88, %v454
  %456 = vmatmul.f32.gmra.mxu0 %v245
  %v457 = vpop.f32.mrf.mxu0
  %v458 = vadd.f32 %v88, %v457
  %459 = vmatmul.f32.gmra.mxu0 %v248
  %v460 = vpop.f32.mrf.mxu0
  %v461 = vadd.f32 %v88, %v460
  %462 = vmatmul.f32.gmra.mxu0 %v251
  %v463 = vpop.f32.mrf.mxu0
  %v464 = vadd.f32 %v88, %v463
  %465 = vmatmul.f32.gmra.mxu0 %v254
  %v466 = vpop.f32.mrf.mxu0
  %v467 = vadd.f32 %v88, %v466
  %468 = vmatmul.f32.gmra.mxu0 %v257
  %v469 = vpop.f32.mrf.mxu0
  %v470 = vadd.f32 %v88, %v469
  %471 = vmatmul.f32.gmra.mxu0 %v260
  %v472 = vpop.f32.mrf.mxu0
  %v473 = vadd.f32 %v88, %v472
  %474 = vmatmul.f32.gmra.mxu0 %v263
  %v475 = vpop.f32.mrf.mxu0
  %v476 = vadd.f32 %v88, %v475
  %477 = vmatmul.f32.gmra.mxu0 %v266
  %v478 = vpop.f32.mrf.mxu0
  %v479 = vadd.f32 %v88, %v478
  %480 = vmatmul.f32.gmra.mxu0 %v269
  %v481 = vpop.f32.mrf.mxu0
  %v482 = vadd.f32 %v88, %v481
  %483 = vmatmul.f32.gmra.mxu0 %v272
  %v484 = vpop.f32.mrf.mxu0
  %v485 = vadd.f32 %v88, %v484
  %486 = vmatmul.f32.gmra.mxu0 %v275
  %v487 = vpop.f32.mrf.mxu0
  %v488 = vadd.f32 %v88, %v487
  %489 = vmatmul.f32.gmra.mxu0 %v278
  %v490 = vpop.f32.mrf.mxu0
  %v491 = vadd.f32 %v88, %v490
  %492 = vmatmul.f32.gmra.mxu0 %v281
  %v493 = vpop.f32.mrf.mxu0
  %v494 = vadd.f32 %v88, %v493
  %495 = vdwg.mxu0
  %vm496 = vcmask 523264
  %v497 = vsel %vm496, %v305, 0.0
  %v498 = vsel %vm496, %v308, 0.0
  %v499 = vadd.f32 %v497, %v498
  %v500 = vsel %vm496, %v311, 0.0
  %v501 = vadd.f32 %v499, %v500
  %v502 = vsel %vm496, %v314, 0.0
  %v503 = vadd.f32 %v501, %v502
  %v504 = vsel %vm496, %v317, 0.0
  %v505 = vadd.f32 %v503, %v504
  %v506 = vsel %vm496, %v320, 0.0
  %v507 = vadd.f32 %v505, %v506
  %v508 = vsel %vm496, %v323, 0.0
  %v509 = vadd.f32 %v507, %v508
  %v510 = vsel %vm496, %v326, 0.0
  %v511 = vadd.f32 %v509, %v510
  %v512 = vsel %vm496, %v329, 0.0
  %v513 = vadd.f32 %v511, %v512
  %v514 = vsel %vm496, %v332, 0.0
  %v515 = vadd.f32 %v513, %v514
  %v516 = vsel %vm496, %v335, 0.0
  %v517 = vadd.f32 %v515, %v516
  %v518 = vsel %vm496, %v338, 0.0
  %v519 = vadd.f32 %v517, %v518
  %v520 = vsel %vm496, %v341, 0.0
  %v521 = vadd.f32 %v519, %v520
  %v522 = vsel %vm496, %v344, 0.0
  %v523 = vadd.f32 %v521, %v522
  %v524 = vsel %vm496, %v347, 0.0
  %v525 = vadd.f32 %v523, %v524
  %v526 = vsel %vm496, %v350, 0.0
  %v527 = vadd.f32 %v525, %v526
  %v528 = vsel %vm496, %v353, 0.0
  %v529 = vadd.f32 %v527, %v528
  %v530 = vsel %vm496, %v356, 0.0
  %v531 = vadd.f32 %v529, %v530
  %v532 = vsel %vm496, %v359, 0.0
  %v533 = vadd.f32 %v531, %v532
  %v534 = vsel %vm496, %v362, 0.0
  %v535 = vadd.f32 %v533, %v534
  %v536 = vsel %vm496, %v365, 0.0
  %v537 = vadd.f32 %v535, %v536
  %v538 = vsel %vm496, %v368, 0.0
  %v539 = vadd.f32 %v537, %v538
  %v540 = vsel %vm496, %v371, 0.0
  %v541 = vadd.f32 %v539, %v540
  %v542 = vsel %vm496, %v374, 0.0
  %v543 = vadd.f32 %v541, %v542
  %v544 = vsel %vm496, %v377, 0.0
  %v545 = vadd.f32 %v543, %v544
  %v546 = vsel %vm496, %v380, 0.0
  %v547 = vadd.f32 %v545, %v546
  %v548 = vsel %vm496, %v383, 0.0
  %v549 = vadd.f32 %v547, %v548
  %v550 = vsel %vm496, %v386, 0.0
  %v551 = vadd.f32 %v549, %v550
  %v552 = vsel %vm496, %v389, 0.0
  %v553 = vadd.f32 %v551, %v552
  %v554 = vsel %vm496, %v392, 0.0
  %v555 = vadd.f32 %v553, %v554
  %v556 = vsel %vm496, %v395, 0.0
  %v557 = vadd.f32 %v555, %v556
  %v558 = vsel %vm496, %v398, 0.0
  %v559 = vadd.f32 %v557, %v558
  %v560 = vsel %vm496, %v401, 0.0
  %v561 = vadd.f32 %v559, %v560
  %v562 = vsel %vm496, %v404, 0.0
  %v563 = vadd.f32 %v561, %v562
  %v564 = vsel %vm496, %v407, 0.0
  %v565 = vadd.f32 %v563, %v564
  %v566 = vsel %vm496, %v410, 0.0
  %v567 = vadd.f32 %v565, %v566
  %v568 = vsel %vm496, %v413, 0.0
  %v569 = vadd.f32 %v567, %v568
  %v570 = vsel %vm496, %v416, 0.0
  %v571 = vadd.f32 %v569, %v570
  %v572 = vsel %vm496, %v419, 0.0
  %v573 = vadd.f32 %v571, %v572
  %v574 = vsel %vm496, %v422, 0.0
  %v575 = vadd.f32 %v573, %v574
  %v576 = vsel %vm496, %v425, 0.0
  %v577 = vadd.f32 %v575, %v576
  %v578 = vsel %vm496, %v428, 0.0
  %v579 = vadd.f32 %v577, %v578
  %v580 = vsel %vm496, %v431, 0.0
  %v581 = vadd.f32 %v579, %v580
  %v582 = vsel %vm496, %v434, 0.0
  %v583 = vadd.f32 %v581, %v582
  %v584 = vsel %vm496, %v437, 0.0
  %v585 = vadd.f32 %v583, %v584
  %v586 = vsel %vm496, %v440, 0.0
  %v587 = vadd.f32 %v585, %v586
  %v588 = vsel %vm496, %v443, 0.0
  %v589 = vadd.f32 %v587, %v588
  %v590 = vsel %vm496, %v446, 0.0
  %v591 = vadd.f32 %v589, %v590
  %v592 = vsel %vm496, %v449, 0.0
  %v593 = vadd.f32 %v591, %v592
  %v594 = vsel %vm496, %v452, 0.0
  %v595 = vadd.f32 %v593, %v594
  %v596 = vsel %vm496, %v455, 0.0
  %v597 = vadd.f32 %v595, %v596
  %v598 = vsel %vm496, %v458, 0.0
  %v599 = vadd.f32 %v597, %v598
  %v600 = vsel %vm496, %v461, 0.0
  %v601 = vadd.f32 %v599, %v600
  %v602 = vsel %vm496, %v464, 0.0
  %v603 = vadd.f32 %v601, %v602
  %v604 = vsel %vm496, %v467, 0.0
  %v605 = vadd.f32 %v603, %v604
  %v606 = vsel %vm496, %v470, 0.0
  %v607 = vadd.f32 %v605, %v606
  %v608 = vsel %vm496, %v473, 0.0
  %v609 = vadd.f32 %v607, %v608
  %v610 = vsel %vm496, %v476, 0.0
  %v611 = vadd.f32 %v609, %v610
  %v612 = vsel %vm496, %v479, 0.0
  %v613 = vadd.f32 %v611, %v612
  %v614 = vsel %vm496, %v482, 0.0
  %v615 = vadd.f32 %v613, %v614
  %v616 = vsel %vm496, %v485, 0.0
  %v617 = vadd.f32 %v615, %v616
  %v618 = vsel %vm496, %v488, 0.0
  %v619 = vadd.f32 %v617, %v618
  %v620 = vsel %vm496, %v491, 0.0
  %v621 = vadd.f32 %v619, %v620
  %v622 = vsel %vm496, %v494, 0.0
  %v623 = vadd.f32 %v621, %v622
  %v624 = vrot.slane %v623, 4
  %v625 = vadd.f32 %v623, %v624
  %v626 = vrot.slane %v625, 2
  %v627 = vadd.f32 %v625, %v626
  %v628 = vrot.slane %v627, 1
  %v629 = vadd.f32 %v627, %v628
  %v630 = vrcp.pop 512.0
  %v631 = vmul.f32 512.0, %v630
  %v632 = vsub.f32 1.0, %v631
  %v633 = vmul.f32 %v630, %v632
  %v634 = vadd.f32 %v630, %v633
  %vm635 = vweird.f32 %v630
  %v636 = vsel %vm635, %v630, %v634
  %v637 = vmul.f32 %v629, %v636
  %v638 = vsub.f32 %v305, %v637
  %v639 = vsub.f32 %v308, %v637
  %v640 = vsub.f32 %v311, %v637
  %v641 = vsub.f32 %v314, %v637
  %v642 = vsub.f32 %v317, %v637
  %v643 = vsub.f32 %v320, %v637
  %v644 = vsub.f32 %v323, %v637
  %v645 = vsub.f32 %v326, %v637
  %v646 = vsub.f32 %v329, %v637
  %v647 = vsub.f32 %v332, %v637
  %v648 = vsub.f32 %v335, %v637
  %v649 = vsub.f32 %v338, %v637
  %v650 = vsub.f32 %v341, %v637
  %v651 = vsub.f32 %v344, %v637
  %v652 = vsub.f32 %v347, %v637
  %v653 = vsub.f32 %v350, %v637
  %v654 = vsub.f32 %v353, %v637
  %v655 = vsub.f32 %v356, %v637
  %v656 = vsub.f32 %v359, %v637
  %v657 = vsub.f32 %v362, %v637
  %v658 = vsub.f32 %v365, %v637
  %v659 = vsub.f32 %v368, %v637
  %v660 = vsub.f32 %v371, %v637
  %v661 = vsub.f32 %v374, %v637
  %v662 = vsub.f32 %v377, %v637
  %v663 = vsub.f32 %v380, %v637
  %v664 = vsub.f32 %v383, %v637
  %v665 = vsub.f32 %v386, %v637
  %v666 = vsub.f32 %v389, %v637
  %v667 = vsub.f32 %v392, %v637
  %v668 = vsub.f32 %v395, %v637
  %v669 = vsub.f32 %v398, %v637
  %v670 = vsub.f32 %v401, %v637
  %v671 = vsub.f32 %v404, %v637
  %v672 = vsub.f32 %v407, %v637
  %v673 = vsub.f32 %v410, %v637
  %v674 = vsub.f32 %v413, %v637
  %v675 = vsub.f32 %v416, %v637
  %v676 = vsub.f32 %v419, %v637
  %v677 = vsub.f32 %v422, %v637
  %v678 = vsub.f32 %v425, %v637
  %v679 = vsub.f32 %v428, %v637
  %v680 = vsub.f32 %v431, %v637
  %v681 = vsub.f32 %v434, %v637
  %v682 = vsub.f32 %v437, %v637
  %v683 = vsub.f32 %v440, %v637
  %v684 = vsub.f32 %v443, %v637
  %v685 = vsub.f32 %v446, %v637
  %v686 = vsub.f32 %v449, %v637
  %v687 = vsub.f32 %v452, %v637
  %v688 = vsub.f32 %v455, %v637
  %v689 = vsub.f32 %v458, %v637
  %v690 = vsub.f32 %v461, %v637
  %v691 = vsub.f32 %v464, %v637
  %v692 = vsub.f32 %v467, %v637
  %v693 = vsub.f32 %v470, %v637
  %v694 = vsub.f32 %v473, %v637
  %v695 = vsub.f32 %v476, %v637
  %v696 = vsub.f32 %v479, %v637
  %v697 = vsub.f32 %v482, %v637
  %v698 = vsub.f32 %v485, %v637
  %v699 = vsub.f32 %v488, %v637
  %v700 = vsub.f32 %v491, %v637
  %v701 = vsub.f32 %v494, %v637
  %v702 = vmul.f32 %v638, %v638
  %v703 = vmul.f32 %v639, %v639
  %v704 = vmul.f32 %v640, %v640
  %v705 = vmul.f32 %v641, %v641
  %v706 = vmul.f32 %v642, %v642
  %v707 = vmul.f32 %v643, %v643
  %v708 = vmul.f32 %v644, %v644
  %v709 = vmul.f32 %v645, %v645
  %v710 = vmul.f32 %v646, %v646
  %v711 = vmul.f32 %v647, %v647
  %v712 = vmul.f32 %v648, %v648
  %v713 = vmul.f32 %v649, %v649
  %v714 = vmul.f32 %v650, %v650
  %v715 = vmul.f32 %v651, %v651
  %v716 = vmul.f32 %v652, %v652
  %v717 = vmul.f32 %v653, %v653
  %v718 = vmul.f32 %v654, %v654
  %v719 = vmul.f32 %v655, %v655
  %v720 = vmul.f32 %v656, %v656
  %v721 = vmul.f32 %v657, %v657
  %v722 = vmul.f32 %v658, %v658
  %v723 = vmul.f32 %v659, %v659
  %v724 = vmul.f32 %v660, %v660
  %v725 = vmul.f32 %v661, %v661
  %v726 = vmul.f32 %v662, %v662
  %v727 = vmul.f32 %v663, %v663
  %v728 = vmul.f32 %v664, %v664
  %v729 = vmul.f32 %v665, %v665
  %v730 = vmul.f32 %v666, %v666
  %v731 = vmul.f32 %v667, %v667
  %v732 = vmul.f32 %v668, %v668
  %v733 = vmul.f32 %v669, %v669
  %v734 = vmul.f32 %v670, %v670
  %v735 = vmul.f32 %v671, %v671
  %v736 = vmul.f32 %v672, %v672
  %v737 = vmul.f32 %v673, %v673
  %v738 = vmul.f32 %v674, %v674
  %v739 = vmul.f32 %v675, %v675
  %v740 = vmul.f32 %v676, %v676
  %v741 = vmul.f32 %v677, %v677
  %v742 = vmul.f32 %v678, %v678
  %v743 = vmul.f32 %v679, %v679
  %v744 = vmul.f32 %v680, %v680
  %v745 = vmul.f32 %v681, %v681
  %v746 = vmul.f32 %v682, %v682
  %v747 = vmul.f32 %v683, %v683
  %v748 = vmul.f32 %v684, %v684
  %v749 = vmul.f32 %v685, %v685
  %v750 = vmul.f32 %v686, %v686
  %v751 = vmul.f32 %v687, %v687
  %v752 = vmul.f32 %v688, %v688
  %v753 = vmul.f32 %v689, %v689
  %v754 = vmul.f32 %v690, %v690
  %v755 = vmul.f32 %v691, %v691
  %v756 = vmul.f32 %v692, %v692
  %v757 = vmul.f32 %v693, %v693
  %v758 = vmul.f32 %v694, %v694
  %v759 = vmul.f32 %v695, %v695
  %v760 = vmul.f32 %v696, %v696
  %v761 = vmul.f32 %v697, %v697
  %v762 = vmul.f32 %v698, %v698
  %v763 = vmul.f32 %v699, %v699
  %v764 = vmul.f32 %v700, %v700
  %v765 = vmul.f32 %v701, %v701
  %v766 = vsel %vm496, %v702, 0.0
  %v767 = vsel %vm496, %v703, 0.0
  %v768 = vadd.f32 %v766, %v767
  %v769 = vsel %vm496, %v704, 0.0
  %v770 = vadd.f32 %v768, %v769
  %v771 = vsel %vm496, %v705, 0.0
  %v772 = vadd.f32 %v770, %v771
  %v773 = vsel %vm496, %v706, 0.0
  %v774 = vadd.f32 %v772, %v773
  %v775 = vsel %vm496, %v707, 0.0
  %v776 = vadd.f32 %v774, %v775
  %v777 = vsel %vm496, %v708, 0.0
  %v778 = vadd.f32 %v776, %v777
  %v779 = vsel %vm496, %v709, 0.0
  %v780 = vadd.f32 %v778, %v779
  %v781 = vsel %vm496, %v710, 0.0
  %v782 = vadd.f32 %v780, %v781
  %v783 = vsel %vm496, %v711, 0.0
  %v784 = vadd.f32 %v782, %v783
  %v785 = vsel %vm496, %v712, 0.0
  %v786 = vadd.f32 %v784, %v785
  %v787 = vsel %vm496, %v713, 0.0
  %v788 = vadd.f32 %v786, %v787
  %v789 = vsel %vm496, %v714, 0.0
  %v790 = vadd.f32 %v788, %v789
  %v791 = vsel %vm496, %v715, 0.0
  %v792 = vadd.f32 %v790, %v791
  %v793 = vsel %vm496, %v716, 0.0
  %v794 = vadd.f32 %v792, %v793
  %v795 = vsel %vm496, %v717, 0.0
  %v796 = vadd.f32 %v794, %v795
  %v797 = vsel %vm496, %v718, 0.0
  %v798 = vadd.f32 %v796, %v797
  %v799 = vsel %vm496, %v719, 0.0
  %v800 = vadd.f32 %v798, %v799
  %v801 = vsel %vm496, %v720, 0.0
  %v802 = vadd.f32 %v800, %v801
  %v803 = vsel %vm496, %v721, 0.0
  %v804 = vadd.f32 %v802, %v803
  %v805 = vsel %vm496, %v722, 0.0
  %v806 = vadd.f32 %v804, %v805
  %v807 = vsel %vm496, %v723, 0.0
  %v808 = vadd.f32 %v806, %v807
  %v809 = vsel %vm496, %v724, 0.0
  %v810 = vadd.f32 %v808, %v809
  %v811 = vsel %vm496, %v725, 0.0
  %v812 = vadd.f32 %v810, %v811
  %v813 = vsel %vm496, %v726, 0.0
  %v814 = vadd.f32 %v812, %v813
  %v815 = vsel %vm496, %v727, 0.0
  %v816 = vadd.f32 %v814, %v815
  %v817 = vsel %vm496, %v728, 0.0
  %v818 = vadd.f32 %v816, %v817
  %v819 = vsel %vm496, %v729, 0.0
  %v820 = vadd.f32 %v818, %v819
  %v821 = vsel %vm496, %v730, 0.0
  %v822 = vadd.f32 %v820, %v821
  %v823 = vsel %vm496, %v731, 0.0
  %v824 = vadd.f32 %v822, %v823
  %v825 = vsel %vm496, %v732, 0.0
  %v826 = vadd.f32 %v824, %v825
  %v827 = vsel %vm496, %v733, 0.0
  %v828 = vadd.f32 %v826, %v827
  %v829 = vsel %vm496, %v734, 0.0
  %v830 = vadd.f32 %v828, %v829
  %v831 = vsel %vm496, %v735, 0.0
  %v832 = vadd.f32 %v830, %v831
  %v833 = vsel %vm496, %v736, 0.0
  %v834 = vadd.f32 %v832, %v833
  %v835 = vsel %vm496, %v737, 0.0
  %v836 = vadd.f32 %v834, %v835
  %v837 = vsel %vm496, %v738, 0.0
  %v838 = vadd.f32 %v836, %v837
  %v839 = vsel %vm496, %v739, 0.0
  %v840 = vadd.f32 %v838, %v839
  %v841 = vsel %vm496, %v740, 0.0
  %v842 = vadd.f32 %v840, %v841
  %v843 = vsel %vm496, %v741, 0.0
  %v844 = vadd.f32 %v842, %v843
  %v845 = vsel %vm496, %v742, 0.0
  %v846 = vadd.f32 %v844, %v845
  %v847 = vsel %vm496, %v743, 0.0
  %v848 = vadd.f32 %v846, %v847
  %v849 = vsel %vm496, %v744, 0.0
  %v850 = vadd.f32 %v848, %v849
  %v851 = vsel %vm496, %v745, 0.0
  %v852 = vadd.f32 %v850, %v851
  %v853 = vsel %vm496, %v746, 0.0
  %v854 = vadd.f32 %v852, %v853
  %v855 = vsel %vm496, %v747, 0.0
  %v856 = vadd.f32 %v854, %v855
  %v857 = vsel %vm496, %v748, 0.0
  %v858 = vadd.f32 %v856, %v857
  %v859 = vsel %vm496, %v749, 0.0
  %v860 = vadd.f32 %v858, %v859
  %v861 = vsel %vm496, %v750, 0.0
  %v862 = vadd.f32 %v860, %v861
  %v863 = vsel %vm496, %v751, 0.0
  %v864 = vadd.f32 %v862, %v863
  %v865 = vsel %vm496, %v752, 0.0
  %v866 = vadd.f32 %v864, %v865
  %v867 = vsel %vm496, %v753, 0.0
  %v868 = vadd.f32 %v866, %v867
  %v869 = vsel %vm496, %v754, 0.0
  %v870 = vadd.f32 %v868, %v869
  %v871 = vsel %vm496, %v755, 0.0
  %v872 = vadd.f32 %v870, %v871
  %v873 = vsel %vm496, %v756, 0.0
  %v874 = vadd.f32 %v872, %v873
  %v875 = vsel %vm496, %v757, 0.0
  %v876 = vadd.f32 %v874, %v875
  %v877 = vsel %vm496, %v758, 0.0
  %v878 = vadd.f32 %v876, %v877
  %v879 = vsel %vm496, %v759, 0.0
  %v880 = vadd.f32 %v878, %v879
  %v881 = vsel %vm496, %v760, 0.0
  %v882 = vadd.f32 %v880, %v881
  %v883 = vsel %vm496, %v761, 0.0
  %v884 = vadd.f32 %v882, %v883
  %v885 = vsel %vm496, %v762, 0.0
  %v886 = vadd.f32 %v884, %v885
  %v887 = vsel %vm496, %v763, 0.0
  %v888 = vadd.f32 %v886, %v887
  %v889 = vsel %vm496, %v764, 0.0
  %v890 = vadd.f32 %v888, %v889
  %v891 = vsel %vm496, %v765, 0.0
  %v892 = vadd.f32 %v890, %v891
  %v893 = vrot.slane %v892, 4
  %v894 = vadd.f32 %v892, %v893
  %v895 = vrot.slane %v894, 2
  %v896 = vadd.f32 %v894, %v895
  %v897 = vrot.slane %v896, 1
  %v898 = vadd.f32 %v896, %v897
  %v899 = vmul.f32 %v898, %v636
  %v900 = vadd.f32 %v899, 1e-05
  %v901 = vrsqrt.pop %v900
  %v902 = vmul.f32 %v901, %v900
  %v903 = vmul.f32 %v902, %v901
  %v904 = vmul.f32 0.5, %v903
  %v905 = vsub.f32 1.5, %v904
  %v906 = vmul.f32 %v901, %v905
  %vm907 = vweird.f32 %v900
  %vm908 = vweird.f32 %v901
  %vm909 = vmor %vm907, %vm908
  %v910 = vsel %vm909, %v901, %v906
  %v911 = vld [vmem:[%s3] sm:$0x1]
  %v912 = vmul.f32 %v910, %v911
  %v913 = vperm.slane %v912, 0
  %v914 = vmul.f32 %v638, %v913
  %v915 = vmul.f32 %v639, %v913
  %v916 = vmul.f32 %v640, %v913
  %v917 = vmul.f32 %v641, %v913
  %v918 = vmul.f32 %v642, %v913
  %v919 = vmul.f32 %v643, %v913
  %v920 = vmul.f32 %v644, %v913
  %v921 = vmul.f32 %v645, %v913
  %v922 = vmul.f32 %v646, %v913
  %v923 = vmul.f32 %v647, %v913
  %v924 = vmul.f32 %v648, %v913
  %v925 = vmul.f32 %v649, %v913
  %v926 = vmul.f32 %v650, %v913
  %v927 = vmul.f32 %v651, %v913
  %v928 = vmul.f32 %v652, %v913
  %v929 = vmul.f32 %v653, %v913
  %v930 = vmul.f32 %v654, %v913
  %v931 = vmul.f32 %v655, %v913
  %v932 = vmul.f32 %v656, %v913
  %v933 = vmul.f32 %v657, %v913
  %v934 = vmul.f32 %v658, %v913
  %v935 = vmul.f32 %v659, %v913
  %v936 = vmul.f32 %v660, %v913
  %v937 = vmul.f32 %v661, %v913
  %v938 = vmul.f32 %v662, %v913
  %v939 = vmul.f32 %v663, %v913
  %v940 = vmul.f32 %v664, %v913
  %v941 = vmul.f32 %v665, %v913
  %v942 = vmul.f32 %v666, %v913
  %v943 = vmul.f32 %v667, %v913
  %v944 = vmul.f32 %v668, %v913
  %v945 = vmul.f32 %v669, %v913
  %v946 = vmul.f32 %v670, %v913
  %v947 = vmul.f32 %v671, %v913
  %v948 = vmul.f32 %v672, %v913
  %v949 = vmul.f32 %v673, %v913
  %v950 = vmul.f32 %v674, %v913
  %v951 = vmul.f32 %v675, %v913
  %v952 = vmul.f32 %v676, %v913
  %v953 = vmul.f32 %v677, %v913
  %v954 = vmul.f32 %v678, %v913
  %v955 = vmul.f32 %v679, %v913
  %v956 = vmul.f32 %v680, %v913
  %v957 = vmul.f32 %v681, %v913
  %v958 = vmul.f32 %v682, %v913
  %v959 = vmul.f32 %v683, %v913
  %v960 = vmul.f32 %v684, %v913
  %v961 = vmul.f32 %v685, %v913
  %v962 = vmul.f32 %v686, %v913
  %v963 = vmul.f32 %v687, %v913
  %v964 = vmul.f32 %v688, %v913
  %v965 = vmul.f32 %v689, %v913
  %v966 = vmul.f32 %v690, %v913
  %v967 = vmul.f32 %v691, %v913
  %v968 = vmul.f32 %v692, %v913
  %v969 = vmul.f32 %v693, %v913
  %v970 = vmul.f32 %v694, %v913
  %v971 = vmul.f32 %v695, %v913
  %v972 = vmul.f32 %v696, %v913
  %v973 = vmul.f32 %v697, %v913
  %v974 = vmul.f32 %v698, %v913
  %v975 = vmul.f32 %v699, %v913
  %v976 = vmul.f32 %v700, %v913
  %v977 = vmul.f32 %v701, %v913
  %v978 = vld [vmem:[%s4] sm:$0x1]
  %v980 = vperm.slane %v978, 0
  %v982 = vadd.f32 %v914, %v980
  %v983 = vadd.f32 %v915, %v980
  %v984 = vadd.f32 %v916, %v980
  %v985 = vadd.f32 %v917, %v980
  %v986 = vadd.f32 %v918, %v980
  %v987 = vadd.f32 %v919, %v980
  %v988 = vadd.f32 %v920, %v980
  %v989 = vadd.f32 %v921, %v980
  %v990 = vadd.f32 %v922, %v980
  %v991 = vadd.f32 %v923, %v980
  %v992 = vadd.f32 %v924, %v980
  %v993 = vadd.f32 %v925, %v980
  %v994 = vadd.f32 %v926, %v980
  %v995 = vadd.f32 %v927, %v980
  %v996 = vadd.f32 %v928, %v980
  %v997 = vadd.f32 %v929, %v980
  %v998 = vadd.f32 %v930, %v980
  %v999 = vadd.f32 %v931, %v980
  %v1000 = vadd.f32 %v932, %v980
  %v1001 = vadd.f32 %v933, %v980
  %v1002 = vadd.f32 %v934, %v980
  %v1003 = vadd.f32 %v935, %v980
  %v1004 = vadd.f32 %v936, %v980
  %v1005 = vadd.f32 %v937, %v980
  %v1006 = vadd.f32 %v938, %v980
  %v1007 = vadd.f32 %v939, %v980
  %v1008 = vadd.f32 %v940, %v980
  %v1009 = vadd.f32 %v941, %v980
  %v1010 = vadd.f32 %v942, %v980
  %v1011 = vadd.f32 %v943, %v980
  %v1012 = vadd.f32 %v944, %v980
  %v1013 = vadd.f32 %v945, %v980
  %v1014 = vadd.f32 %v946, %v980
  %v1015 = vadd.f32 %v947, %v980
  %v1016 = vadd.f32 %v948, %v980
  %v1017 = vadd.f32 %v949, %v980
  %v1018 = vadd.f32 %v950, %v980
  %v1019 = vadd.f32 %v951, %v980
  %v1020 = vadd.f32 %v952, %v980
  %v1021 = vadd.f32 %v953, %v980
  %v1022 = vadd.f32 %v954, %v980
  %v1023 = vadd.f32 %v955, %v980
  %v1024 = vadd.f32 %v956, %v980
  %v1025 = vadd.f32 %v957, %v980
  %v1026 = vadd.f32 %v958, %v980
  %v1027 = vadd.f32 %v959, %v980
  %v1028 = vadd.f32 %v960, %v980
  %v1029 = vadd.f32 %v961, %v980
  %v1030 = vadd.f32 %v962, %v980
  %v1031 = vadd.f32 %v963, %v980
  %v1032 = vadd.f32 %v964, %v980
  %v1033 = vadd.f32 %v965, %v980
  %v1034 = vadd.f32 %v966, %v980
  %v1035 = vadd.f32 %v967, %v980
  %v1036 = vadd.f32 %v968, %v980
  %v1037 = vadd.f32 %v969, %v980
  %v1038 = vadd.f32 %v970, %v980
  %v1039 = vadd.f32 %v971, %v980
  %v1040 = vadd.f32 %v972, %v980
  %v1041 = vadd.f32 %v973, %v980
  %v1042 = vadd.f32 %v974, %v980
  %v1043 = vadd.f32 %v975, %v980
  %v1044 = vadd.f32 %v976, %v980
  %v1045 = vadd.f32 %v977, %v980
  %v1046 = vmax.f32 %v982, 0.0
  %v1047 = vmax.f32 %v983, 0.0
  %v1048 = vmax.f32 %v984, 0.0
  %v1049 = vmax.f32 %v985, 0.0
  %v1050 = vmax.f32 %v986, 0.0
  %v1051 = vmax.f32 %v987, 0.0
  %v1052 = vmax.f32 %v988, 0.0
  %v1053 = vmax.f32 %v989, 0.0
  %v1054 = vmax.f32 %v990, 0.0
  %v1055 = vmax.f32 %v991, 0.0
  %v1056 = vmax.f32 %v992, 0.0
  %v1057 = vmax.f32 %v993, 0.0
  %v1058 = vmax.f32 %v994, 0.0
  %v1059 = vmax.f32 %v995, 0.0
  %v1060 = vmax.f32 %v996, 0.0
  %v1061 = vmax.f32 %v997, 0.0
  %v1062 = vmax.f32 %v998, 0.0
  %v1063 = vmax.f32 %v999, 0.0
  %v1064 = vmax.f32 %v1000, 0.0
  %v1065 = vmax.f32 %v1001, 0.0
  %v1066 = vmax.f32 %v1002, 0.0
  %v1067 = vmax.f32 %v1003, 0.0
  %v1068 = vmax.f32 %v1004, 0.0
  %v1069 = vmax.f32 %v1005, 0.0
  %v1070 = vmax.f32 %v1006, 0.0
  %v1071 = vmax.f32 %v1007, 0.0
  %v1072 = vmax.f32 %v1008, 0.0
  %v1073 = vmax.f32 %v1009, 0.0
  %v1074 = vmax.f32 %v1010, 0.0
  %v1075 = vmax.f32 %v1011, 0.0
  %v1076 = vmax.f32 %v1012, 0.0
  %v1077 = vmax.f32 %v1013, 0.0
  %v1078 = vmax.f32 %v1014, 0.0
  %v1079 = vmax.f32 %v1015, 0.0
  %v1080 = vmax.f32 %v1016, 0.0
  %v1081 = vmax.f32 %v1017, 0.0
  %v1082 = vmax.f32 %v1018, 0.0
  %v1083 = vmax.f32 %v1019, 0.0
  %v1084 = vmax.f32 %v1020, 0.0
  %v1085 = vmax.f32 %v1021, 0.0
  %v1086 = vmax.f32 %v1022, 0.0
  %v1087 = vmax.f32 %v1023, 0.0
  %v1088 = vmax.f32 %v1024, 0.0
  %v1089 = vmax.f32 %v1025, 0.0
  %v1090 = vmax.f32 %v1026, 0.0
  %v1091 = vmax.f32 %v1027, 0.0
  %v1092 = vmax.f32 %v1028, 0.0
  %v1093 = vmax.f32 %v1029, 0.0
  %v1094 = vmax.f32 %v1030, 0.0
  %v1095 = vmax.f32 %v1031, 0.0
  %v1096 = vmax.f32 %v1032, 0.0
  %v1097 = vmax.f32 %v1033, 0.0
  %v1098 = vmax.f32 %v1034, 0.0
  %v1099 = vmax.f32 %v1035, 0.0
  %v1100 = vmax.f32 %v1036, 0.0
  %v1101 = vmax.f32 %v1037, 0.0
  %v1102 = vmax.f32 %v1038, 0.0
  %v1103 = vmax.f32 %v1039, 0.0
  %v1104 = vmax.f32 %v1040, 0.0
  %v1105 = vmax.f32 %v1041, 0.0
  %v1106 = vmax.f32 %v1042, 0.0
  %v1107 = vmax.f32 %v1043, 0.0
  %v1108 = vmax.f32 %v1044, 0.0
  %v1109 = vmax.f32 %v1045, 0.0
  %1110 = vst.msk [vmem:[%s5] sm:$0xff] %vm496, %v1046
  %1111 = vst.msk [vmem:[%s5 + $0x8] sm:$0xff] %vm496, %v1047
  %1112 = vst.msk [vmem:[%s5 + $0x10] sm:$0xff] %vm496, %v1048
  %1113 = vst.msk [vmem:[%s5 + $0x18] sm:$0xff] %vm496, %v1049
  %1114 = vst.msk [vmem:[%s5 + $0x20] sm:$0xff] %vm496, %v1050
  %1115 = vst.msk [vmem:[%s5 + $0x28] sm:$0xff] %vm496, %v1051
  %1116 = vst.msk [vmem:[%s5 + $0x30] sm:$0xff] %vm496, %v1052
  %1117 = vst.msk [vmem:[%s5 + $0x38] sm:$0xff] %vm496, %v1053
  %1118 = vst.msk [vmem:[%s5 + $0x40] sm:$0xff] %vm496, %v1054
  %1119 = vst.msk [vmem:[%s5 + $0x48] sm:$0xff] %vm496, %v1055
  %1120 = vst.msk [vmem:[%s5 + $0x50] sm:$0xff] %vm496, %v1056
  %1121 = vst.msk [vmem:[%s5 + $0x58] sm:$0xff] %vm496, %v1057
  %1122 = vst.msk [vmem:[%s5 + $0x60] sm:$0xff] %vm496, %v1058
  %1123 = vst.msk [vmem:[%s5 + $0x68] sm:$0xff] %vm496, %v1059
  %1124 = vst.msk [vmem:[%s5 + $0x70] sm:$0xff] %vm496, %v1060
  %1125 = vst.msk [vmem:[%s5 + $0x78] sm:$0xff] %vm496, %v1061
  %1126 = vst.msk [vmem:[%s5 + $0x80] sm:$0xff] %vm496, %v1062
  %1127 = vst.msk [vmem:[%s5 + $0x88] sm:$0xff] %vm496, %v1063
  %1128 = vst.msk [vmem:[%s5 + $0x90] sm:$0xff] %vm496, %v1064
  %1129 = vst.msk [vmem:[%s5 + $0x98] sm:$0xff] %vm496, %v1065
  %1130 = vst.msk [vmem:[%s5 + $0xa0] sm:$0xff] %vm496, %v1066
  %1131 = vst.msk [vmem:[%s5 + $0xa8] sm:$0xff] %vm496, %v1067
  %1132 = vst.msk [vmem:[%s5 + $0xb0] sm:$0xff] %vm496, %v1068
  %1133 = vst.msk [vmem:[%s5 + $0xb8] sm:$0xff] %vm496, %v1069
  %1134 = vst.msk [vmem:[%s5 + $0xc0] sm:$0xff] %vm496, %v1070
  %1135 = vst.msk [vmem:[%s5 + $0xc8] sm:$0xff] %vm496, %v1071
  %1136 = vst.msk [vmem:[%s5 + $0xd0] sm:$0xff] %vm496, %v1072
  %1137 = vst.msk [vmem:[%s5 + $0xd8] sm:$0xff] %vm496, %v1073
  %1138 = vst.msk [vmem:[%s5 + $0xe0] sm:$0xff] %vm496, %v1074
  %1139 = vst.msk [vmem:[%s5 + $0xe8] sm:$0xff] %vm496, %v1075
  %1140 = vst.msk [vmem:[%s5 + $0xf0] sm:$0xff] %vm496, %v1076
  %1141 = vst.msk [vmem:[%s5 + $0xf8] sm:$0xff] %vm496, %v1077
  %1142 = vst.msk [vmem:[%s5 + $0x100] sm:$0xff] %vm496, %v1078
  %1143 = vst.msk [vmem:[%s5 + $0x108] sm:$0xff] %vm496, %v1079
  %1144 = vst.msk [vmem:[%s5 + $0x110] sm:$0xff] %vm496, %v1080
  %1145 = vst.msk [vmem:[%s5 + $0x118] sm:$0xff] %vm496, %v1081
  %1146 = vst.msk [vmem:[%s5 + $0x120] sm:$0xff] %vm496, %v1082
  %1147 = vst.msk [vmem:[%s5 + $0x128] sm:$0xff] %vm496, %v1083
  %1148 = vst.msk [vmem:[%s5 + $0x130] sm:$0xff] %vm496, %v1084
  %1149 = vst.msk [vmem:[%s5 + $0x138] sm:$0xff] %vm496, %v1085
  %1150 = vst.msk [vmem:[%s5 + $0x140] sm:$0xff] %vm496, %v1086
  %1151 = vst.msk [vmem:[%s5 + $0x148] sm:$0xff] %vm496, %v1087
  %1152 = vst.msk [vmem:[%s5 + $0x150] sm:$0xff] %vm496, %v1088
  %1153 = vst.msk [vmem:[%s5 + $0x158] sm:$0xff] %vm496, %v1089
  %1154 = vst.msk [vmem:[%s5 + $0x160] sm:$0xff] %vm496, %v1090
  %1155 = vst.msk [vmem:[%s5 + $0x168] sm:$0xff] %vm496, %v1091
  %1156 = vst.msk [vmem:[%s5 + $0x170] sm:$0xff] %vm496, %v1092
  %1157 = vst.msk [vmem:[%s5 + $0x178] sm:$0xff] %vm496, %v1093
  %1158 = vst.msk [vmem:[%s5 + $0x180] sm:$0xff] %vm496, %v1094
  %1159 = vst.msk [vmem:[%s5 + $0x188] sm:$0xff] %vm496, %v1095
  %1160 = vst.msk [vmem:[%s5 + $0x190] sm:$0xff] %vm496, %v1096
  %1161 = vst.msk [vmem:[%s5 + $0x198] sm:$0xff] %vm496, %v1097
  %1162 = vst.msk [vmem:[%s5 + $0x1a0] sm:$0xff] %vm496, %v1098
  %1163 = vst.msk [vmem:[%s5 + $0x1a8] sm:$0xff] %vm496, %v1099
  %1164 = vst.msk [vmem:[%s5 + $0x1b0] sm:$0xff] %vm496, %v1100
  %1165 = vst.msk [vmem:[%s5 + $0x1b8] sm:$0xff] %vm496, %v1101
  %1166 = vst.msk [vmem:[%s5 + $0x1c0] sm:$0xff] %vm496, %v1102
  %1167 = vst.msk [vmem:[%s5 + $0x1c8] sm:$0xff] %vm496, %v1103
  %1168 = vst.msk [vmem:[%s5 + $0x1d0] sm:$0xff] %vm496, %v1104
  %1169 = vst.msk [vmem:[%s5 + $0x1d8] sm:$0xff] %vm496, %v1105
  %1170 = vst.msk [vmem:[%s5 + $0x1e0] sm:$0xff] %vm496, %v1106
  %1171 = vst.msk [vmem:[%s5 + $0x1e8] sm:$0xff] %vm496, %v1107
  %1172 = vst.msk [vmem:[%s5 + $0x1f0] sm:$0xff] %vm496, %v1108
  %1173 = vst.msk [vmem:[%s5 + $0x1f8] sm:$0xff] %vm496, %v1109
  // Predicated region
  $region22: #{_lambda_.4} parent=0 // pred_check
    _
  $region23: #{_lambda_.4} parent=0 // pred_check_branch
    %1175 = sbr.rel (0) target = $region25
  $region24: #{_lambda_.4} parent=0 // pred_region
    _
  $region25: #{_lambda_.4} parent=0 // pred_fallthru
    _
  // Predicated region
  $region26: #{_lambda_.4} parent=0 // pred_check
    _
  $region27: #{_lambda_.4} parent=0 // pred_check_branch
    %1177 = sbr.rel (0) target = $region29
  $region28: #{_lambda_.4} parent=0 // pred_region
    _
  $region29: #{_lambda_.4} parent=0 // pred_fallthru
    _

// kernel: _lambda_.5
$region0: #{_lambda_.5}
  #allocation0 [shape = 'u32[]', space=smem, size = 0x4, offset = 0x4, fixed_abs, tag = 'smem constant byte address 0x4 - core index']
  #allocation1 [shape = 'u32[72,128]{1,0:T(1,128)}', space=vmem, size = 0x9000, scoped, tag = 'internal scratch']
  %s0 = inlined_call_operand.vmem [shape: f32[128,576], index: 0, kind: input, shape index: {}]
  %s1 = inlined_call_operand.vmem [shape: f32[576,64], index: 1, kind: input, shape index: {}]
  %s2 = inlined_call_operand.vmem [shape: f32[1,64], index: 2, kind: input, shape index: {}]
  %s3 = inlined_call_operand.vmem [shape: f32[1,64], index: 3, kind: input, shape index: {}]
  %s4 = inlined_call_operand.vmem [shape: f32[1,64], index: 4, kind: input, shape index: {}]
  %s5 = inlined_call_operand.vmem [shape: f32[128,64], index: 5, kind: output, shape index: {}]
  %s6 = sld [smem:[#allocation0]]
  $region30: #{_lambda_.5} parent=0
    _
  %s8 = ssub.s32 1, %s6
  %s9 = scalar_select 0, %s8, %s6
  // Predicated region
  $region2: #{_lambda_.5} parent=0 // pred_check
    _
  $region3: #{_lambda_.5} parent=0 // pred_check_branch
    %11 = sbr.rel (0) target = $region5
  $region4: #{_lambda_.5} parent=0 // pred_region
    _
  $region5: #{_lambda_.5} parent=0 // pred_fallthru
    _
  // Predicated region
  $region6: #{_lambda_.5} parent=0 // pred_check
    _
  $region7: #{_lambda_.5} parent=0 // pred_check_branch
    %13 = sbr.rel (0) target = $region9
  $region8: #{_lambda_.5} parent=0 // pred_region
    _
  $region9: #{_lambda_.5} parent=0 // pred_fallthru
    _
  // Predicated region
  $region10: #{_lambda_.5} parent=0 // pred_check
    _
  $region11: #{_lambda_.5} parent=0 // pred_check_branch
    %15 = sbr.rel (0) target = $region13
  $region12: #{_lambda_.5} parent=0 // pred_region
    _
  $region13: #{_lambda_.5} parent=0 // pred_fallthru
    _
  // Predicated region
  $region14: #{_lambda_.5} parent=0 // pred_check
    _
  $region15: #{_lambda_.5} parent=0 // pred_check_branch
    %17 = sbr.rel (0) target = $region17
  $region16: #{_lambda_.5} parent=0 // pred_region
    _
  $region17: #{_lambda_.5} parent=0 // pred_fallthru
    _
  // Predicated region
  $region18: #{_lambda_.5} parent=0 // pred_check
    _
  $region19: #{_lambda_.5} parent=0 // pred_check_branch
    %19 = sbr.rel (0) target = $region21
  $region20: #{_lambda_.5} parent=0 // pred_region
    _
  $region21: #{_lambda_.5} parent=0 // pred_fallthru
    _
  %v20 = vld [vmem:[%s0] sm:$0xff]
  %v21 = vld [vmem:[%s0 + $0x8] sm:$0xff]
  %v22 = vld [vmem:[%s0 + $0x10] sm:$0xff]
  %v23 = vld [vmem:[%s0 + $0x18] sm:$0xff]
  %v24 = vld [vmem:[%s0 + $0x20] sm:$0xff]
  %v25 = vld [vmem:[%s0 + $0x28] sm:$0xff]
  %v26 = vld [vmem:[%s0 + $0x30] sm:$0xff]
  %v27 = vld [vmem:[%s0 + $0x38] sm:$0xff]
  %v28 = vld [vmem:[%s0 + $0x40] sm:$0xff]
  %v29 = vld [vmem:[%s0 + $0x48] sm:$0xff]
  %v30 = vld [vmem:[%s0 + $0x50] sm:$0xff]
  %v31 = vld [vmem:[%s0 + $0x58] sm:$0xff]
  %v32 = vld [vmem:[%s0 + $0x60] sm:$0xff]
  %v33 = vld [vmem:[%s0 + $0x68] sm:$0xff]
  %v34 = vld [vmem:[%s0 + $0x70] sm:$0xff]
  %v35 = vld [vmem:[%s0 + $0x78] sm:$0xff]
  %v36 = vld [vmem:[%s0 + $0x80] sm:$0xff]
  %v37 = vld [vmem:[%s0 + $0x88] sm:$0xff]
  %v38 = vld [vmem:[%s0 + $0x90] sm:$0xff]
  %v39 = vld [vmem:[%s0 + $0x98] sm:$0xff]
  %v40 = vld [vmem:[%s0 + $0xa0] sm:$0xff]
  %v41 = vld [vmem:[%s0 + $0xa8] sm:$0xff]
  %v42 = vld [vmem:[%s0 + $0xb0] sm:$0xff]
  %v43 = vld [vmem:[%s0 + $0xb8] sm:$0xff]
  %v44 = vld [vmem:[%s0 + $0xc0] sm:$0xff]
  %v45 = vld [vmem:[%s0 + $0xc8] sm:$0xff]
  %v46 = vld [vmem:[%s0 + $0xd0] sm:$0xff]
  %v47 = vld [vmem:[%s0 + $0xd8] sm:$0xff]
  %v48 = vld [vmem:[%s0 + $0xe0] sm:$0xff]
  %v49 = vld [vmem:[%s0 + $0xe8] sm:$0xff]
  %v50 = vld [vmem:[%s0 + $0xf0] sm:$0xff]
  %v51 = vld [vmem:[%s0 + $0xf8] sm:$0xff]
  %v52 = vld [vmem:[%s0 + $0x100] sm:$0xff]
  %v53 = vld [vmem:[%s0 + $0x108] sm:$0xff]
  %v54 = vld [vmem:[%s0 + $0x110] sm:$0xff]
  %v55 = vld [vmem:[%s0 + $0x118] sm:$0xff]
  %v56 = vld [vmem:[%s0 + $0x120] sm:$0xff]
  %v57 = vld [vmem:[%s0 + $0x128] sm:$0xff]
  %v58 = vld [vmem:[%s0 + $0x130] sm:$0xff]
  %v59 = vld [vmem:[%s0 + $0x138] sm:$0xff]
  %v60 = vld [vmem:[%s0 + $0x140] sm:$0xff]
  %v61 = vld [vmem:[%s0 + $0x148] sm:$0xff]
  %v62 = vld [vmem:[%s0 + $0x150] sm:$0xff]
  %v63 = vld [vmem:[%s0 + $0x158] sm:$0xff]
  %v64 = vld [vmem:[%s0 + $0x160] sm:$0xff]
  %v65 = vld [vmem:[%s0 + $0x168] sm:$0xff]
  %v66 = vld [vmem:[%s0 + $0x170] sm:$0xff]
  %v67 = vld [vmem:[%s0 + $0x178] sm:$0xff]
  %v68 = vld [vmem:[%s0 + $0x180] sm:$0xff]
  %v69 = vld [vmem:[%s0 + $0x188] sm:$0xff]
  %v70 = vld [vmem:[%s0 + $0x190] sm:$0xff]
  %v71 = vld [vmem:[%s0 + $0x198] sm:$0xff]
  %v72 = vld [vmem:[%s0 + $0x1a0] sm:$0xff]
  %v73 = vld [vmem:[%s0 + $0x1a8] sm:$0xff]
  %v74 = vld [vmem:[%s0 + $0x1b0] sm:$0xff]
  %v75 = vld [vmem:[%s0 + $0x1b8] sm:$0xff]
  %v76 = vld [vmem:[%s0 + $0x1c0] sm:$0xff]
  %v77 = vld [vmem:[%s0 + $0x1c8] sm:$0xff]
  %v78 = vld [vmem:[%s0 + $0x1d0] sm:$0xff]
  %v79 = vld [vmem:[%s0 + $0x1d8] sm:$0xff]
  %v80 = vld [vmem:[%s0 + $0x1e0] sm:$0xff]
  %v81 = vld [vmem:[%s0 + $0x1e8] sm:$0xff]
  %v82 = vld [vmem:[%s0 + $0x1f0] sm:$0xff]
  %v83 = vld [vmem:[%s0 + $0x1f8] sm:$0xff]
  %v84 = vld [vmem:[%s0 + $0x200] sm:$0xff]
  %v85 = vld [vmem:[%s0 + $0x208] sm:$0xff]
  %v86 = vld [vmem:[%s0 + $0x210] sm:$0xff]
  %v87 = vld [vmem:[%s0 + $0x218] sm:$0xff]
  %v88 = vld [vmem:[%s0 + $0x220] sm:$0xff]
  %v89 = vld [vmem:[%s0 + $0x228] sm:$0xff]
  %v90 = vld [vmem:[%s0 + $0x230] sm:$0xff]
  %v91 = vld [vmem:[%s0 + $0x238] sm:$0xff]
  %v92 = vld [vmem:[%s0 + $0x240] sm:$0xff]
  %v93 = vld [vmem:[%s0 + $0x248] sm:$0xff]
  %v94 = vld [vmem:[%s0 + $0x250] sm:$0xff]
  %v95 = vld [vmem:[%s0 + $0x258] sm:$0xff]
  %v96 = vld [vmem:[%s0 + $0x260] sm:$0xff]
  %v97 = vld [vmem:[%s0 + $0x268] sm:$0xff]
  %v98 = vld [vmem:[%s0 + $0x270] sm:$0xff]
  %v99 = vld [vmem:[%s0 + $0x278] sm:$0xff]
  %v100 = vld [vmem:[%s1] sm:$0xff]
  %v101 = vld [vmem:[%s1 + $0x8] sm:$0xff]
  %v102 = vld [vmem:[%s1 + $0x10] sm:$0xff]
  %v103 = vld [vmem:[%s1 + $0x18] sm:$0xff]
  %v104 = vld [vmem:[%s1 + $0x20] sm:$0xff]
  %v105 = vld [vmem:[%s1 + $0x28] sm:$0xff]
  %v106 = vld [vmem:[%s1 + $0x30] sm:$0xff]
  %v107 = vld [vmem:[%s1 + $0x38] sm:$0xff]
  %v108 = vld [vmem:[%s1 + $0x40] sm:$0xff]
  %v109 = vld [vmem:[%s1 + $0x48] sm:$0xff]
  %v110 = vld [vmem:[%s1 + $0x50] sm:$0xff]
  %v111 = vld [vmem:[%s1 + $0x58] sm:$0xff]
  %v112 = vld [vmem:[%s1 + $0x60] sm:$0xff]
  %v113 = vld [vmem:[%s1 + $0x68] sm:$0xff]
  %v114 = vld [vmem:[%s1 + $0x70] sm:$0xff]
  %v115 = vld [vmem:[%s1 + $0x78] sm:$0xff]
  %v116 = vld [vmem:[%s1 + $0x80] sm:$0xff]
  %v117 = vld [vmem:[%s1 + $0x88] sm:$0xff]
  %v118 = vld [vmem:[%s1 + $0x90] sm:$0xff]
  %v119 = vld [vmem:[%s1 + $0x98] sm:$0xff]
  %v120 = vld [vmem:[%s1 + $0xa0] sm:$0xff]
  %v121 = vld [vmem:[%s1 + $0xa8] sm:$0xff]
  %v122 = vld [vmem:[%s1 + $0xb0] sm:$0xff]
  %v123 = vld [vmem:[%s1 + $0xb8] sm:$0xff]
  %v124 = vld [vmem:[%s1 + $0xc0] sm:$0xff]
  %v125 = vld [vmem:[%s1 + $0xc8] sm:$0xff]
  %v126 = vld [vmem:[%s1 + $0xd0] sm:$0xff]
  %v127 = vld [vmem:[%s1 + $0xd8] sm:$0xff]
  %v128 = vld [vmem:[%s1 + $0xe0] sm:$0xff]
  %v129 = vld [vmem:[%s1 + $0xe8] sm:$0xff]
  %v130 = vld [vmem:[%s1 + $0xf0] sm:$0xff]
  %v131 = vld [vmem:[%s1 + $0xf8] sm:$0xff]
  %v132 = vld [vmem:[%s1 + $0x100] sm:$0xff]
  %v133 = vld [vmem:[%s1 + $0x108] sm:$0xff]
  %v134 = vld [vmem:[%s1 + $0x110] sm:$0xff]
  %v135 = vld [vmem:[%s1 + $0x118] sm:$0xff]
  %v136 = vld [vmem:[%s1 + $0x120] sm:$0xff]
  %v137 = vld [vmem:[%s1 + $0x128] sm:$0xff]
  %v138 = vld [vmem:[%s1 + $0x130] sm:$0xff]
  %v139 = vld [vmem:[%s1 + $0x138] sm:$0xff]
  %v140 = vld [vmem:[%s1 + $0x140] sm:$0xff]
  %v141 = vld [vmem:[%s1 + $0x148] sm:$0xff]
  %v142 = vld [vmem:[%s1 + $0x150] sm:$0xff]
  %v143 = vld [vmem:[%s1 + $0x158] sm:$0xff]
  %v144 = vld [vmem:[%s1 + $0x160] sm:$0xff]
  %v145 = vld [vmem:[%s1 + $0x168] sm:$0xff]
  %v146 = vld [vmem:[%s1 + $0x170] sm:$0xff]
  %v147 = vld [vmem:[%s1 + $0x178] sm:$0xff]
  %v148 = vld [vmem:[%s1 + $0x180] sm:$0xff]
  %v149 = vld [vmem:[%s1 + $0x188] sm:$0xff]
  %v150 = vld [vmem:[%s1 + $0x190] sm:$0xff]
  %v151 = vld [vmem:[%s1 + $0x198] sm:$0xff]
  %v152 = vld [vmem:[%s1 + $0x1a0] sm:$0xff]
  %v153 = vld [vmem:[%s1 + $0x1a8] sm:$0xff]
  %v154 = vld [vmem:[%s1 + $0x1b0] sm:$0xff]
  %v155 = vld [vmem:[%s1 + $0x1b8] sm:$0xff]
  %v156 = vld [vmem:[%s1 + $0x1c0] sm:$0xff]
  %v157 = vld [vmem:[%s1 + $0x1c8] sm:$0xff]
  %v158 = vld [vmem:[%s1 + $0x1d0] sm:$0xff]
  %v159 = vld [vmem:[%s1 + $0x1d8] sm:$0xff]
  %v160 = vld [vmem:[%s1 + $0x1e0] sm:$0xff]
  %v161 = vld [vmem:[%s1 + $0x1e8] sm:$0xff]
  %v162 = vld [vmem:[%s1 + $0x1f0] sm:$0xff]
  %v163 = vld [vmem:[%s1 + $0x1f8] sm:$0xff]
  %v164 = vld [vmem:[%s1 + $0x200] sm:$0xff]
  %v165 = vld [vmem:[%s1 + $0x208] sm:$0xff]
  %v166 = vld [vmem:[%s1 + $0x210] sm:$0xff]
  %v167 = vld [vmem:[%s1 + $0x218] sm:$0xff]
  %v168 = vld [vmem:[%s1 + $0x220] sm:$0xff]
  %v169 = vld [vmem:[%s1 + $0x228] sm:$0xff]
  %v170 = vld [vmem:[%s1 + $0x230] sm:$0xff]
  %v171 = vld [vmem:[%s1 + $0x238] sm:$0xff]
  %v172 = vld [vmem:[%s2] sm:$0x1]
  %v174 = vperm.slane %v172, 0
  %vm176 = vcmask 523264
  %v178 = vsel %vm176, %v24, 0
  %v181 = vsel %vm176, %v29, 0
  %v184 = vsel %vm176, %v34, 0
  %v187 = vsel %vm176, %v39, 0
  %v190 = vsel %vm176, %v44, 0
  %v193 = vsel %vm176, %v49, 0
  %v196 = vsel %vm176, %v54, 0
  %v199 = vsel %vm176, %v59, 0
  %v202 = vsel %vm176, %v64, 0
  %v205 = vsel %vm176, %v69, 0
  %v208 = vsel %vm176, %v74, 0
  %v211 = vsel %vm176, %v79, 0
  %v214 = vsel %vm176, %v84, 0
  %v217 = vsel %vm176, %v89, 0
  %v220 = vsel %vm176, %v94, 0
  %v223 = vsel %vm176, %v99, 0
  %225 = vmatpush.msra.mxu0 %v115
  %226 = vmatpush.msra.mxu0 %v114
  %227 = vmatpush.msra.mxu0 %v113
  %228 = vmatpush.msra.mxu0 %v112
  %229 = vmatpush.msra.mxu0 %v111
  %230 = vmatpush.msra.mxu0 %v110
  %231 = vmatpush.msra.mxu0 %v109
  %232 = vmatpush.msra.mxu0 %v108
  %233 = vmatpush.msra.mxu0 %v107
  %234 = vmatpush.msra.mxu0 %v106
  %235 = vmatpush.msra.mxu0 %v105
  %236 = vmatpush.msra.mxu0 %v104
  %237 = vmatpush.msra.mxu0 %v103
  %238 = vmatpush.msra.mxu0 %v102
  %239 = vmatpush.msra.mxu0 %v101
  %240 = vmatpush.msra.mxu0 %v100
  %241 = vmatmul.f32.gmra.mxu0 %v20
  %v242 = vpop.f32.mrf.mxu0
  %v243 = vadd.f32 %v174, %v242
  %244 = vmatmul.f32.gmra.mxu0 %v25
  %v245 = vpop.f32.mrf.mxu0
  %v246 = vadd.f32 %v174, %v245
  %247 = vmatmul.f32.gmra.mxu0 %v30
  %v248 = vpop.f32.mrf.mxu0
  %v249 = vadd.f32 %v174, %v248
  %250 = vmatmul.f32.gmra.mxu0 %v35
  %v251 = vpop.f32.mrf.mxu0
  %v252 = vadd.f32 %v174, %v251
  %253 = vmatmul.f32.gmra.mxu0 %v40
  %v254 = vpop.f32.mrf.mxu0
  %v255 = vadd.f32 %v174, %v254
  %256 = vmatmul.f32.gmra.mxu0 %v45
  %v257 = vpop.f32.mrf.mxu0
  %v258 = vadd.f32 %v174, %v257
  %259 = vmatmul.f32.gmra.mxu0 %v50
  %v260 = vpop.f32.mrf.mxu0
  %v261 = vadd.f32 %v174, %v260
  %262 = vmatmul.f32.gmra.mxu0 %v55
  %v263 = vpop.f32.mrf.mxu0
  %v264 = vadd.f32 %v174, %v263
  %265 = vmatmul.f32.gmra.mxu0 %v60
  %v266 = vpop.f32.mrf.mxu0
  %v267 = vadd.f32 %v174, %v266
  %268 = vmatmul.f32.gmra.mxu0 %v65
  %v269 = vpop.f32.mrf.mxu0
  %v270 = vadd.f32 %v174, %v269
  %271 = vmatmul.f32.gmra.mxu0 %v70
  %v272 = vpop.f32.mrf.mxu0
  %v273 = vadd.f32 %v174, %v272
  %274 = vmatmul.f32.gmra.mxu0 %v75
  %v275 = vpop.f32.mrf.mxu0
  %v276 = vadd.f32 %v174, %v275
  %277 = vmatmul.f32.gmra.mxu0 %v80
  %v278 = vpop.f32.mrf.mxu0
  %v279 = vadd.f32 %v174, %v278
  %280 = vmatmul.f32.gmra.mxu0 %v85
  %v281 = vpop.f32.mrf.mxu0
  %v282 = vadd.f32 %v174, %v281
  %283 = vmatmul.f32.gmra.mxu0 %v90
  %v284 = vpop.f32.mrf.mxu0
  %v285 = vadd.f32 %v174, %v284
  %286 = vmatmul.f32.gmra.mxu0 %v95
  %v287 = vpop.f32.mrf.mxu0
  %v288 = vadd.f32 %v174, %v287
  %289 = vdwg.mxu0
  %290 = vmatpush.msra.mxu0 %v131
  %291 = vmatpush.msra.mxu0 %v130
  %292 = vmatpush.msra.mxu0 %v129
  %293 = vmatpush.msra.mxu0 %v128
  %294 = vmatpush.msra.mxu0 %v127
  %295 = vmatpush.msra.mxu0 %v126
  %296 = vmatpush.msra.mxu0 %v125
  %297 = vmatpush.msra.mxu0 %v124
  %298 = vmatpush.msra.mxu0 %v123
  %299 = vmatpush.msra.mxu0 %v122
  %300 = vmatpush.msra.mxu0 %v121
  %301 = vmatpush.msra.mxu0 %v120
  %302 = vmatpush.msra.mxu0 %v119
  %303 = vmatpush.msra.mxu0 %v118
  %304 = vmatpush.msra.mxu0 %v117
  %305 = vmatpush.msra.mxu0 %v116
  %306 = vmatmul.f32.gmra.mxu0 %v21
  %v307 = vpop.f32.mrf.mxu0
  %v308 = vadd.f32 %v243, %v307
  %309 = vmatmul.f32.gmra.mxu0 %v26
  %v310 = vpop.f32.mrf.mxu0
  %v311 = vadd.f32 %v246, %v310
  %312 = vmatmul.f32.gmra.mxu0 %v31
  %v313 = vpop.f32.mrf.mxu0
  %v314 = vadd.f32 %v249, %v313
  %315 = vmatmul.f32.gmra.mxu0 %v36
  %v316 = vpop.f32.mrf.mxu0
  %v317 = vadd.f32 %v252, %v316
  %318 = vmatmul.f32.gmra.mxu0 %v41
  %v319 = vpop.f32.mrf.mxu0
  %v320 = vadd.f32 %v255, %v319
  %321 = vmatmul.f32.gmra.mxu0 %v46
  %v322 = vpop.f32.mrf.mxu0
  %v323 = vadd.f32 %v258, %v322
  %324 = vmatmul.f32.gmra.mxu0 %v51
  %v325 = vpop.f32.mrf.mxu0
  %v326 = vadd.f32 %v261, %v325
  %327 = vmatmul.f32.gmra.mxu0 %v56
  %v328 = vpop.f32.mrf.mxu0
  %v329 = vadd.f32 %v264, %v328
  %330 = vmatmul.f32.gmra.mxu0 %v61
  %v331 = vpop.f32.mrf.mxu0
  %v332 = vadd.f32 %v267, %v331
  %333 = vmatmul.f32.gmra.mxu0 %v66
  %v334 = vpop.f32.mrf.mxu0
  %v335 = vadd.f32 %v270, %v334
  %336 = vmatmul.f32.gmra.mxu0 %v71
  %v337 = vpop.f32.mrf.mxu0
  %v338 = vadd.f32 %v273, %v337
  %339 = vmatmul.f32.gmra.mxu0 %v76
  %v340 = vpop.f32.mrf.mxu0
  %v341 = vadd.f32 %v276, %v340
  %342 = vmatmul.f32.gmra.mxu0 %v81
  %v343 = vpop.f32.mrf.mxu0
  %v344 = vadd.f32 %v279, %v343
  %345 = vmatmul.f32.gmra.mxu0 %v86
  %v346 = vpop.f32.mrf.mxu0
  %v347 = vadd.f32 %v282, %v346
  %348 = vmatmul.f32.gmra.mxu0 %v91
  %v349 = vpop.f32.mrf.mxu0
  %v350 = vadd.f32 %v285, %v349
  %351 = vmatmul.f32.gmra.mxu0 %v96
  %v352 = vpop.f32.mrf.mxu0
  %v353 = vadd.f32 %v288, %v352
  %354 = vdwg.mxu0
  %355 = vmatpush.msra.mxu0 %v147
  %356 = vmatpush.msra.mxu0 %v146
  %357 = vmatpush.msra.mxu0 %v145
  %358 = vmatpush.msra.mxu0 %v144
  %359 = vmatpush.msra.mxu0 %v143
  %360 = vmatpush.msra.mxu0 %v142
  %361 = vmatpush.msra.mxu0 %v141
  %362 = vmatpush.msra.mxu0 %v140
  %363 = vmatpush.msra.mxu0 %v139
  %364 = vmatpush.msra.mxu0 %v138
  %365 = vmatpush.msra.mxu0 %v137
  %366 = vmatpush.msra.mxu0 %v136
  %367 = vmatpush.msra.mxu0 %v135
  %368 = vmatpush.msra.mxu0 %v134
  %369 = vmatpush.msra.mxu0 %v133
  %370 = vmatpush.msra.mxu0 %v132
  %371 = vmatmul.f32.gmra.mxu0 %v22
  %v372 = vpop.f32.mrf.mxu0
  %v373 = vadd.f32 %v308, %v372
  %374 = vmatmul.f32.gmra.mxu0 %v27
  %v375 = vpop.f32.mrf.mxu0
  %v376 = vadd.f32 %v311, %v375
  %377 = vmatmul.f32.gmra.mxu0 %v32
  %v378 = vpop.f32.mrf.mxu0
  %v379 = vadd.f32 %v314, %v378
  %380 = vmatmul.f32.gmra.mxu0 %v37
  %v381 = vpop.f32.mrf.mxu0
  %v382 = vadd.f32 %v317, %v381
  %383 = vmatmul.f32.gmra.mxu0 %v42
  %v384 = vpop.f32.mrf.mxu0
  %v385 = vadd.f32 %v320, %v384
  %386 = vmatmul.f32.gmra.mxu0 %v47
  %v387 = vpop.f32.mrf.mxu0
  %v388 = vadd.f32 %v323, %v387
  %389 = vmatmul.f32.gmra.mxu0 %v52
  %v390 = vpop.f32.mrf.mxu0
  %v391 = vadd.f32 %v326, %v390
  %392 = vmatmul.f32.gmra.mxu0 %v57
  %v393 = vpop.f32.mrf.mxu0
  %v394 = vadd.f32 %v329, %v393
  %395 = vmatmul.f32.gmra.mxu0 %v62
  %v396 = vpop.f32.mrf.mxu0
  %v397 = vadd.f32 %v332, %v396
  %398 = vmatmul.f32.gmra.mxu0 %v67
  %v399 = vpop.f32.mrf.mxu0
  %v400 = vadd.f32 %v335, %v399
  %401 = vmatmul.f32.gmra.mxu0 %v72
  %v402 = vpop.f32.mrf.mxu0
  %v403 = vadd.f32 %v338, %v402
  %404 = vmatmul.f32.gmra.mxu0 %v77
  %v405 = vpop.f32.mrf.mxu0
  %v406 = vadd.f32 %v341, %v405
  %407 = vmatmul.f32.gmra.mxu0 %v82
  %v408 = vpop.f32.mrf.mxu0
  %v409 = vadd.f32 %v344, %v408
  %410 = vmatmul.f32.gmra.mxu0 %v87
  %v411 = vpop.f32.mrf.mxu0
  %v412 = vadd.f32 %v347, %v411
  %413 = vmatmul.f32.gmra.mxu0 %v92
  %v414 = vpop.f32.mrf.mxu0
  %v415 = vadd.f32 %v350, %v414
  %416 = vmatmul.f32.gmra.mxu0 %v97
  %v417 = vpop.f32.mrf.mxu0
  %v418 = vadd.f32 %v353, %v417
  %419 = vdwg.mxu0
  %420 = vmatpush.msra.mxu0 %v163
  %421 = vmatpush.msra.mxu0 %v162
  %422 = vmatpush.msra.mxu0 %v161
  %423 = vmatpush.msra.mxu0 %v160
  %424 = vmatpush.msra.mxu0 %v159
  %425 = vmatpush.msra.mxu0 %v158
  %426 = vmatpush.msra.mxu0 %v157
  %427 = vmatpush.msra.mxu0 %v156
  %428 = vmatpush.msra.mxu0 %v155
  %429 = vmatpush.msra.mxu0 %v154
  %430 = vmatpush.msra.mxu0 %v153
  %431 = vmatpush.msra.mxu0 %v152
  %432 = vmatpush.msra.mxu0 %v151
  %433 = vmatpush.msra.mxu0 %v150
  %434 = vmatpush.msra.mxu0 %v149
  %435 = vmatpush.msra.mxu0 %v148
  %436 = vmatmul.f32.gmra.mxu0 %v23
  %v437 = vpop.f32.mrf.mxu0
  %v438 = vadd.f32 %v373, %v437
  %439 = vmatmul.f32.gmra.mxu0 %v28
  %v440 = vpop.f32.mrf.mxu0
  %v441 = vadd.f32 %v376, %v440
  %442 = vmatmul.f32.gmra.mxu0 %v33
  %v443 = vpop.f32.mrf.mxu0
  %v444 = vadd.f32 %v379, %v443
  %445 = vmatmul.f32.gmra.mxu0 %v38
  %v446 = vpop.f32.mrf.mxu0
  %v447 = vadd.f32 %v382, %v446
  %448 = vmatmul.f32.gmra.mxu0 %v43
  %v449 = vpop.f32.mrf.mxu0
  %v450 = vadd.f32 %v385, %v449
  %451 = vmatmul.f32.gmra.mxu0 %v48
  %v452 = vpop.f32.mrf.mxu0
  %v453 = vadd.f32 %v388, %v452
  %454 = vmatmul.f32.gmra.mxu0 %v53
  %v455 = vpop.f32.mrf.mxu0
  %v456 = vadd.f32 %v391, %v455
  %457 = vmatmul.f32.gmra.mxu0 %v58
  %v458 = vpop.f32.mrf.mxu0
  %v459 = vadd.f32 %v394, %v458
  %460 = vmatmul.f32.gmra.mxu0 %v63
  %v461 = vpop.f32.mrf.mxu0
  %v462 = vadd.f32 %v397, %v461
  %463 = vmatmul.f32.gmra.mxu0 %v68
  %v464 = vpop.f32.mrf.mxu0
  %v465 = vadd.f32 %v400, %v464
  %466 = vmatmul.f32.gmra.mxu0 %v73
  %v467 = vpop.f32.mrf.mxu0
  %v468 = vadd.f32 %v403, %v467
  %469 = vmatmul.f32.gmra.mxu0 %v78
  %v470 = vpop.f32.mrf.mxu0
  %v471 = vadd.f32 %v406, %v470
  %472 = vmatmul.f32.gmra.mxu0 %v83
  %v473 = vpop.f32.mrf.mxu0
  %v474 = vadd.f32 %v409, %v473
  %475 = vmatmul.f32.gmra.mxu0 %v88
  %v476 = vpop.f32.mrf.mxu0
  %v477 = vadd.f32 %v412, %v476
  %478 = vmatmul.f32.gmra.mxu0 %v93
  %v479 = vpop.f32.mrf.mxu0
  %v480 = vadd.f32 %v415, %v479
  %481 = vmatmul.f32.gmra.mxu0 %v98
  %v482 = vpop.f32.mrf.mxu0
  %v483 = vadd.f32 %v418, %v482
  %484 = vdwg.mxu0
  %485 = vmatpush.msra.mxu0 0.0
  %486 = vmatpush.msra.mxu0 0.0
  %487 = vmatpush.msra.mxu0 0.0
  %488 = vmatpush.msra.mxu0 0.0
  %489 = vmatpush.msra.mxu0 0.0
  %490 = vmatpush.msra.mxu0 0.0
  %491 = vmatpush.msra.mxu0 0.0
  %492 = vmatpush.msra.mxu0 0.0
  %493 = vmatpush.msra.mxu0 %v171
  %494 = vmatpush.msra.mxu0 %v170
  %495 = vmatpush.msra.mxu0 %v169
  %496 = vmatpush.msra.mxu0 %v168
  %497 = vmatpush.msra.mxu0 %v167
  %498 = vmatpush.msra.mxu0 %v166
  %499 = vmatpush.msra.mxu0 %v165
  %500 = vmatpush.msra.mxu0 %v164
  %501 = vmatmul.f32.gmra.mxu0 %v178
  %v502 = vpop.f32.mrf.mxu0
  %v503 = vadd.f32 %v438, %v502
  %504 = vmatmul.f32.gmra.mxu0 %v181
  %v505 = vpop.f32.mrf.mxu0
  %v506 = vadd.f32 %v441, %v505
  %507 = vmatmul.f32.gmra.mxu0 %v184
  %v508 = vpop.f32.mrf.mxu0
  %v509 = vadd.f32 %v444, %v508
  %510 = vmatmul.f32.gmra.mxu0 %v187
  %v511 = vpop.f32.mrf.mxu0
  %v512 = vadd.f32 %v447, %v511
  %513 = vmatmul.f32.gmra.mxu0 %v190
  %v514 = vpop.f32.mrf.mxu0
  %v515 = vadd.f32 %v450, %v514
  %516 = vmatmul.f32.gmra.mxu0 %v193
  %v517 = vpop.f32.mrf.mxu0
  %v518 = vadd.f32 %v453, %v517
  %519 = vmatmul.f32.gmra.mxu0 %v196
  %v520 = vpop.f32.mrf.mxu0
  %v521 = vadd.f32 %v456, %v520
  %522 = vmatmul.f32.gmra.mxu0 %v199
  %v523 = vpop.f32.mrf.mxu0
  %v524 = vadd.f32 %v459, %v523
  %525 = vmatmul.f32.gmra.mxu0 %v202
  %v526 = vpop.f32.mrf.mxu0
  %v527 = vadd.f32 %v462, %v526
  %528 = vmatmul.f32.gmra.mxu0 %v205
  %v529 = vpop.f32.mrf.mxu0
  %v530 = vadd.f32 %v465, %v529
  %531 = vmatmul.f32.gmra.mxu0 %v208
  %v532 = vpop.f32.mrf.mxu0
  %v533 = vadd.f32 %v468, %v532
  %534 = vmatmul.f32.gmra.mxu0 %v211
  %v535 = vpop.f32.mrf.mxu0
  %v536 = vadd.f32 %v471, %v535
  %537 = vmatmul.f32.gmra.mxu0 %v214
  %v538 = vpop.f32.mrf.mxu0
  %v539 = vadd.f32 %v474, %v538
  %540 = vmatmul.f32.gmra.mxu0 %v217
  %v541 = vpop.f32.mrf.mxu0
  %v542 = vadd.f32 %v477, %v541
  %543 = vmatmul.f32.gmra.mxu0 %v220
  %v544 = vpop.f32.mrf.mxu0
  %v545 = vadd.f32 %v480, %v544
  %546 = vmatmul.f32.gmra.mxu0 %v223
  %v547 = vpop.f32.mrf.mxu0
  %v548 = vadd.f32 %v483, %v547
  %549 = vdwg.mxu0
  %v550 = vsel %vm176, %v503, 0.0
  %v551 = vsel %vm176, %v506, 0.0
  %v552 = vadd.f32 %v550, %v551
  %v553 = vsel %vm176, %v509, 0.0
  %v554 = vadd.f32 %v552, %v553
  %v555 = vsel %vm176, %v512, 0.0
  %v556 = vadd.f32 %v554, %v555
  %v557 = vsel %vm176, %v515, 0.0
  %v558 = vadd.f32 %v556, %v557
  %v559 = vsel %vm176, %v518, 0.0
  %v560 = vadd.f32 %v558, %v559
  %v561 = vsel %vm176, %v521, 0.0
  %v562 = vadd.f32 %v560, %v561
  %v563 = vsel %vm176, %v524, 0.0
  %v564 = vadd.f32 %v562, %v563
  %v565 = vsel %vm176, %v527, 0.0
  %v566 = vadd.f32 %v564, %v565
  %v567 = vsel %vm176, %v530, 0.0
  %v568 = vadd.f32 %v566, %v567
  %v569 = vsel %vm176, %v533, 0.0
  %v570 = vadd.f32 %v568, %v569
  %v571 = vsel %vm176, %v536, 0.0
  %v572 = vadd.f32 %v570, %v571
  %v573 = vsel %vm176, %v539, 0.0
  %v574 = vadd.f32 %v572, %v573
  %v575 = vsel %vm176, %v542, 0.0
  %v576 = vadd.f32 %v574, %v575
  %v577 = vsel %vm176, %v545, 0.0
  %v578 = vadd.f32 %v576, %v577
  %v579 = vsel %vm176, %v548, 0.0
  %v580 = vadd.f32 %v578, %v579
  %v581 = vrot.slane %v580, 4
  %v582 = vadd.f32 %v580, %v581
  %v583 = vrot.slane %v582, 2
  %v584 = vadd.f32 %v582, %v583
  %v585 = vrot.slane %v584, 1
  %v586 = vadd.f32 %v584, %v585
  %v587 = vrcp.pop 128.0
  %v588 = vmul.f32 128.0, %v587
  %v589 = vsub.f32 1.0, %v588
  %v590 = vmul.f32 %v587, %v589
  %v591 = vadd.f32 %v587, %v590
  %vm592 = vweird.f32 %v587
  %v593 = vsel %vm592, %v587, %v591
  %v594 = vmul.f32 %v586, %v593
  %v595 = vsub.f32 %v503, %v594
  %v596 = vsub.f32 %v506, %v594
  %v597 = vsub.f32 %v509, %v594
  %v598 = vsub.f32 %v512, %v594
  %v599 = vsub.f32 %v515, %v594
  %v600 = vsub.f32 %v518, %v594
  %v601 = vsub.f32 %v521, %v594
  %v602 = vsub.f32 %v524, %v594
  %v603 = vsub.f32 %v527, %v594
  %v604 = vsub.f32 %v530, %v594
  %v605 = vsub.f32 %v533, %v594
  %v606 = vsub.f32 %v536, %v594
  %v607 = vsub.f32 %v539, %v594
  %v608 = vsub.f32 %v542, %v594
  %v609 = vsub.f32 %v545, %v594
  %v610 = vsub.f32 %v548, %v594
  %v611 = vmul.f32 %v595, %v595
  %v612 = vmul.f32 %v596, %v596
  %v613 = vmul.f32 %v597, %v597
  %v614 = vmul.f32 %v598, %v598
  %v615 = vmul.f32 %v599, %v599
  %v616 = vmul.f32 %v600, %v600
  %v617 = vmul.f32 %v601, %v601
  %v618 = vmul.f32 %v602, %v602
  %v619 = vmul.f32 %v603, %v603
  %v620 = vmul.f32 %v604, %v604
  %v621 = vmul.f32 %v605, %v605
  %v622 = vmul.f32 %v606, %v606
  %v623 = vmul.f32 %v607, %v607
  %v624 = vmul.f32 %v608, %v608
  %v625 = vmul.f32 %v609, %v609
  %v626 = vmul.f32 %v610, %v610
  %v627 = vsel %vm176, %v611, 0.0
  %v628 = vsel %vm176, %v612, 0.0
  %v629 = vadd.f32 %v627, %v628
  %v630 = vsel %vm176, %v613, 0.0
  %v631 = vadd.f32 %v629, %v630
  %v632 = vsel %vm176, %v614, 0.0
  %v633 = vadd.f32 %v631, %v632
  %v634 = vsel %vm176, %v615, 0.0
  %v635 = vadd.f32 %v633, %v634
  %v636 = vsel %vm176, %v616, 0.0
  %v637 = vadd.f32 %v635, %v636
  %v638 = vsel %vm176, %v617, 0.0
  %v639 = vadd.f32 %v637, %v638
  %v640 = vsel %vm176, %v618, 0.0
  %v641 = vadd.f32 %v639, %v640
  %v642 = vsel %vm176, %v619, 0.0
  %v643 = vadd.f32 %v641, %v642
  %v644 = vsel %vm176, %v620, 0.0
  %v645 = vadd.f32 %v643, %v644
  %v646 = vsel %vm176, %v621, 0.0
  %v647 = vadd.f32 %v645, %v646
  %v648 = vsel %vm176, %v622, 0.0
  %v649 = vadd.f32 %v647, %v648
  %v650 = vsel %vm176, %v623, 0.0
  %v651 = vadd.f32 %v649, %v650
  %v652 = vsel %vm176, %v624, 0.0
  %v653 = vadd.f32 %v651, %v652
  %v654 = vsel %vm176, %v625, 0.0
  %v655 = vadd.f32 %v653, %v654
  %v656 = vsel %vm176, %v626, 0.0
  %v657 = vadd.f32 %v655, %v656
  %v658 = vrot.slane %v657, 4
  %v659 = vadd.f32 %v657, %v658
  %v660 = vrot.slane %v659, 2
  %v661 = vadd.f32 %v659, %v660
  %v662 = vrot.slane %v661, 1
  %v663 = vadd.f32 %v661, %v662
  %v664 = vmul.f32 %v663, %v593
  %v665 = vadd.f32 %v664, 1e-05
  %v666 = vrsqrt.pop %v665
  %v667 = vmul.f32 %v666, %v665
  %v668 = vmul.f32 %v667, %v666
  %v669 = vmul.f32 0.5, %v668
  %v670 = vsub.f32 1.5, %v669
  %v671 = vmul.f32 %v666, %v670
  %vm672 = vweird.f32 %v665
  %vm673 = vweird.f32 %v666
  %vm674 = vmor %vm672, %vm673
  %v675 = vsel %vm674, %v666, %v671
  %v676 = vld [vmem:[%s3] sm:$0x1]
  %v677 = vmul.f32 %v675, %v676
  %v678 = vperm.slane %v677, 0
  %v679 = vmul.f32 %v595, %v678
  %v680 = vmul.f32 %v596, %v678
  %v681 = vmul.f32 %v597, %v678
  %v682 = vmul.f32 %v598, %v678
  %v683 = vmul.f32 %v599, %v678
  %v684 = vmul.f32 %v600, %v678
  %v685 = vmul.f32 %v601, %v678
  %v686 = vmul.f32 %v602, %v678
  %v687 = vmul.f32 %v603, %v678
  %v688 = vmul.f32 %v604, %v678
  %v689 = vmul.f32 %v605, %v678
  %v690 = vmul.f32 %v606, %v678
  %v691 = vmul.f32 %v607, %v678
  %v692 = vmul.f32 %v608, %v678
  %v693 = vmul.f32 %v609, %v678
  %v694 = vmul.f32 %v610, %v678
  %v695 = vld [vmem:[%s4] sm:$0x1]
  %v697 = vperm.slane %v695, 0
  %v699 = vadd.f32 %v679, %v697
  %v700 = vadd.f32 %v680, %v697
  %v701 = vadd.f32 %v681, %v697
  %v702 = vadd.f32 %v682, %v697
  %v703 = vadd.f32 %v683, %v697
  %v704 = vadd.f32 %v684, %v697
  %v705 = vadd.f32 %v685, %v697
  %v706 = vadd.f32 %v686, %v697
  %v707 = vadd.f32 %v687, %v697
  %v708 = vadd.f32 %v688, %v697
  %v709 = vadd.f32 %v689, %v697
  %v710 = vadd.f32 %v690, %v697
  %v711 = vadd.f32 %v691, %v697
  %v712 = vadd.f32 %v692, %v697
  %v713 = vadd.f32 %v693, %v697
  %v714 = vadd.f32 %v694, %v697
  %v715 = vmax.f32 %v699, 0.0
  %v716 = vmax.f32 %v700, 0.0
  %v717 = vmax.f32 %v701, 0.0
  %v718 = vmax.f32 %v702, 0.0
  %v719 = vmax.f32 %v703, 0.0
  %v720 = vmax.f32 %v704, 0.0
  %v721 = vmax.f32 %v705, 0.0
  %v722 = vmax.f32 %v706, 0.0
  %v723 = vmax.f32 %v707, 0.0
  %v724 = vmax.f32 %v708, 0.0
  %v725 = vmax.f32 %v709, 0.0
  %v726 = vmax.f32 %v710, 0.0
  %v727 = vmax.f32 %v711, 0.0
  %v728 = vmax.f32 %v712, 0.0
  %v729 = vmax.f32 %v713, 0.0
  %v730 = vmax.f32 %v714, 0.0
  %731 = vst.msk [vmem:[%s5] sm:$0xff] %vm176, %v715
  %732 = vst.msk [vmem:[%s5 + $0x8] sm:$0xff] %vm176, %v716
  %733 = vst.msk [vmem:[%s5 + $0x10] sm:$0xff] %vm176, %v717
  %734 = vst.msk [vmem:[%s5 + $0x18] sm:$0xff] %vm176, %v718
  %735 = vst.msk [vmem:[%s5 + $0x20] sm:$0xff] %vm176, %v719
  %736 = vst.msk [vmem:[%s5 + $0x28] sm:$0xff] %vm176, %v720
  %737 = vst.msk [vmem:[%s5 + $0x30] sm:$0xff] %vm176, %v721
  %738 = vst.msk [vmem:[%s5 + $0x38] sm:$0xff] %vm176, %v722
  %739 = vst.msk [vmem:[%s5 + $0x40] sm:$0xff] %vm176, %v723
  %740 = vst.msk [vmem:[%s5 + $0x48] sm:$0xff] %vm176, %v724
  %741 = vst.msk [vmem:[%s5 + $0x50] sm:$0xff] %vm176, %v725
  %742 = vst.msk [vmem:[%s5 + $0x58] sm:$0xff] %vm176, %v726
  %743 = vst.msk [vmem:[%s5 + $0x60] sm:$0xff] %vm176, %v727
  %744 = vst.msk [vmem:[%s5 + $0x68] sm:$0xff] %vm176, %v728
  %745 = vst.msk [vmem:[%s5 + $0x70] sm:$0xff] %vm176, %v729
  %746 = vst.msk [vmem:[%s5 + $0x78] sm:$0xff] %vm176, %v730
  // Predicated region
  $region22: #{_lambda_.5} parent=0 // pred_check
    _
  $region23: #{_lambda_.5} parent=0 // pred_check_branch
    %748 = sbr.rel (0) target = $region25
  $region24: #{_lambda_.5} parent=0 // pred_region
    _
  $region25: #{_lambda_.5} parent=0 // pred_fallthru
    _
  // Predicated region
  $region26: #{_lambda_.5} parent=0 // pred_check
    _
  $region27: #{_lambda_.5} parent=0 // pred_check_branch
    %750 = sbr.rel (0) target = $region29
  $region28: #{_lambda_.5} parent=0 // pred_region
    _
  $region29: #{_lambda_.5} parent=0 // pred_fallthru
    _

// kernel: _lambda_.7
$region0: #{_lambda_.7}
  #allocation0 [shape = 'u32[]', space=smem, size = 0x4, offset = 0x4, fixed_abs, tag = 'smem constant byte address 0x4 - core index']
  #allocation1 [shape = 'u32[72,128]{1,0:T(1,128)}', space=vmem, size = 0x9000, scoped, tag = 'internal scratch']
  %s0 = inlined_call_operand.vmem [shape: f32[8,576], index: 0, kind: input, shape index: {}]
  %s1 = inlined_call_operand.vmem [shape: f32[576,64], index: 1, kind: input, shape index: {}]
  %s2 = inlined_call_operand.vmem [shape: f32[1,64], index: 2, kind: input, shape index: {}]
  %s3 = inlined_call_operand.vmem [shape: f32[1,64], index: 3, kind: input, shape index: {}]
  %s4 = inlined_call_operand.vmem [shape: f32[1,64], index: 4, kind: input, shape index: {}]
  %s5 = inlined_call_operand.vmem [shape: f32[8,64], index: 5, kind: output, shape index: {}]
  %s6 = sld [smem:[#allocation0]]
  $region30: #{_lambda_.7} parent=0
    _
  %s8 = ssub.s32 1, %s6
  %s9 = scalar_select 0, %s8, %s6
  // Predicated region
  $region2: #{_lambda_.7} parent=0 // pred_check
    _
  $region3: #{_lambda_.7} parent=0 // pred_check_branch
    %11 = sbr.rel (0) target = $region5
  $region4: #{_lambda_.7} parent=0 // pred_region
    _
  $region5: #{_lambda_.7} parent=0 // pred_fallthru
    _
  // Predicated region
  $region6: #{_lambda_.7} parent=0 // pred_check
    _
  $region7: #{_lambda_.7} parent=0 // pred_check_branch
    %13 = sbr.rel (0) target = $region9
  $region8: #{_lambda_.7} parent=0 // pred_region
    _
  $region9: #{_lambda_.7} parent=0 // pred_fallthru
    _
  // Predicated region
  $region10: #{_lambda_.7} parent=0 // pred_check
    _
  $region11: #{_lambda_.7} parent=0 // pred_check_branch
    %15 = sbr.rel (0) target = $region13
  $region12: #{_lambda_.7} parent=0 // pred_region
    _
  $region13: #{_lambda_.7} parent=0 // pred_fallthru
    _
  // Predicated region
  $region14: #{_lambda_.7} parent=0 // pred_check
    _
  $region15: #{_lambda_.7} parent=0 // pred_check_branch
    %17 = sbr.rel (0) target = $region17
  $region16: #{_lambda_.7} parent=0 // pred_region
    _
  $region17: #{_lambda_.7} parent=0 // pred_fallthru
    _
  // Predicated region
  $region18: #{_lambda_.7} parent=0 // pred_check
    _
  $region19: #{_lambda_.7} parent=0 // pred_check_branch
    %19 = sbr.rel (0) target = $region21
  $region20: #{_lambda_.7} parent=0 // pred_region
    _
  $region21: #{_lambda_.7} parent=0 // pred_fallthru
    _
  %v20 = vld [vmem:[%s0] sm:$0xff]
  %v21 = vld [vmem:[%s0 + $0x8] sm:$0xff]
  %v22 = vld [vmem:[%s0 + $0x10] sm:$0xff]
  %v23 = vld [vmem:[%s0 + $0x18] sm:$0xff]
  %v24 = vld [vmem:[%s0 + $0x20] sm:$0xff]
  %v25 = vld [vmem:[%s1] sm:$0xff]
  %v26 = vld [vmem:[%s1 + $0x8] sm:$0xff]
  %v27 = vld [vmem:[%s1 + $0x10] sm:$0xff]
  %v28 = vld [vmem:[%s1 + $0x18] sm:$0xff]
  %v29 = vld [vmem:[%s1 + $0x20] sm:$0xff]
  %v30 = vld [vmem:[%s1 + $0x28] sm:$0xff]
  %v31 = vld [vmem:[%s1 + $0x30] sm:$0xff]
  %v32 = vld [vmem:[%s1 + $0x38] sm:$0xff]
  %v33 = vld [vmem:[%s1 + $0x40] sm:$0xff]
  %v34 = vld [vmem:[%s1 + $0x48] sm:$0xff]
  %v35 = vld [vmem:[%s1 + $0x50] sm:$0xff]
  %v36 = vld [vmem:[%s1 + $0x58] sm:$0xff]
  %v37 = vld [vmem:[%s1 + $0x60] sm:$0xff]
  %v38 = vld [vmem:[%s1 + $0x68] sm:$0xff]
  %v39 = vld [vmem:[%s1 + $0x70] sm:$0xff]
  %v40 = vld [vmem:[%s1 + $0x78] sm:$0xff]
  %v41 = vld [vmem:[%s1 + $0x80] sm:$0xff]
  %v42 = vld [vmem:[%s1 + $0x88] sm:$0xff]
  %v43 = vld [vmem:[%s1 + $0x90] sm:$0xff]
  %v44 = vld [vmem:[%s1 + $0x98] sm:$0xff]
  %v45 = vld [vmem:[%s1 + $0xa0] sm:$0xff]
  %v46 = vld [vmem:[%s1 + $0xa8] sm:$0xff]
  %v47 = vld [vmem:[%s1 + $0xb0] sm:$0xff]
  %v48 = vld [vmem:[%s1 + $0xb8] sm:$0xff]
  %v49 = vld [vmem:[%s1 + $0xc0] sm:$0xff]
  %v50 = vld [vmem:[%s1 + $0xc8] sm:$0xff]
  %v51 = vld [vmem:[%s1 + $0xd0] sm:$0xff]
  %v52 = vld [vmem:[%s1 + $0xd8] sm:$0xff]
  %v53 = vld [vmem:[%s1 + $0xe0] sm:$0xff]
  %v54 = vld [vmem:[%s1 + $0xe8] sm:$0xff]
  %v55 = vld [vmem:[%s1 + $0xf0] sm:$0xff]
  %v56 = vld [vmem:[%s1 + $0xf8] sm:$0xff]
  %v57 = vld [vmem:[%s1 + $0x100] sm:$0xff]
  %v58 = vld [vmem:[%s1 + $0x108] sm:$0xff]
  %v59 = vld [vmem:[%s1 + $0x110] sm:$0xff]
  %v60 = vld [vmem:[%s1 + $0x118] sm:$0xff]
  %v61 = vld [vmem:[%s1 + $0x120] sm:$0xff]
  %v62 = vld [vmem:[%s1 + $0x128] sm:$0xff]
  %v63 = vld [vmem:[%s1 + $0x130] sm:$0xff]
  %v64 = vld [vmem:[%s1 + $0x138] sm:$0xff]
  %v65 = vld [vmem:[%s1 + $0x140] sm:$0xff]
  %v66 = vld [vmem:[%s1 + $0x148] sm:$0xff]
  %v67 = vld [vmem:[%s1 + $0x150] sm:$0xff]
  %v68 = vld [vmem:[%s1 + $0x158] sm:$0xff]
  %v69 = vld [vmem:[%s1 + $0x160] sm:$0xff]
  %v70 = vld [vmem:[%s1 + $0x168] sm:$0xff]
  %v71 = vld [vmem:[%s1 + $0x170] sm:$0xff]
  %v72 = vld [vmem:[%s1 + $0x178] sm:$0xff]
  %v73 = vld [vmem:[%s1 + $0x180] sm:$0xff]
  %v74 = vld [vmem:[%s1 + $0x188] sm:$0xff]
  %v75 = vld [vmem:[%s1 + $0x190] sm:$0xff]
  %v76 = vld [vmem:[%s1 + $0x198] sm:$0xff]
  %v77 = vld [vmem:[%s1 + $0x1a0] sm:$0xff]
  %v78 = vld [vmem:[%s1 + $0x1a8] sm:$0xff]
  %v79 = vld [vmem:[%s1 + $0x1b0] sm:$0xff]
  %v80 = vld [vmem:[%s1 + $0x1b8] sm:$0xff]
  %v81 = vld [vmem:[%s1 + $0x1c0] sm:$0xff]
  %v82 = vld [vmem:[%s1 + $0x1c8] sm:$0xff]
  %v83 = vld [vmem:[%s1 + $0x1d0] sm:$0xff]
  %v84 = vld [vmem:[%s1 + $0x1d8] sm:$0xff]
  %v85 = vld [vmem:[%s1 + $0x1e0] sm:$0xff]
  %v86 = vld [vmem:[%s1 + $0x1e8] sm:$0xff]
  %v87 = vld [vmem:[%s1 + $0x1f0] sm:$0xff]
  %v88 = vld [vmem:[%s1 + $0x1f8] sm:$0xff]
  %v89 = vld [vmem:[%s1 + $0x200] sm:$0xff]
  %v90 = vld [vmem:[%s1 + $0x208] sm:$0xff]
  %v91 = vld [vmem:[%s1 + $0x210] sm:$0xff]
  %v92 = vld [vmem:[%s1 + $0x218] sm:$0xff]
  %v93 = vld [vmem:[%s1 + $0x220] sm:$0xff]
  %v94 = vld [vmem:[%s1 + $0x228] sm:$0xff]
  %v95 = vld [vmem:[%s1 + $0x230] sm:$0xff]
  %v96 = vld [vmem:[%s1 + $0x238] sm:$0xff]
  %v97 = vld [vmem:[%s2] sm:$0x1]
  %v99 = vperm.slane %v97, 0
  %vm101 = vcmask 523264
  %v103 = vsel %vm101, %v24, 0
  %105 = vmatpush.msra.mxu0 %v40
  %106 = vmatpush.msra.mxu0 %v39
  %107 = vmatpush.msra.mxu0 %v38
  %108 = vmatpush.msra.mxu0 %v37
  %109 = vmatpush.msra.mxu0 %v36
  %110 = vmatpush.msra.mxu0 %v35
  %111 = vmatpush.msra.mxu0 %v34
  %112 = vmatpush.msra.mxu0 %v33
  %113 = vmatpush.msra.mxu0 %v32
  %114 = vmatpush.msra.mxu0 %v31
  %115 = vmatpush.msra.mxu0 %v30
  %116 = vmatpush.msra.mxu0 %v29
  %117 = vmatpush.msra.mxu0 %v28
  %118 = vmatpush.msra.mxu0 %v27
  %119 = vmatpush.msra.mxu0 %v26
  %120 = vmatpush.msra.mxu0 %v25
  %121 = vmatmul.f32.gmra.mxu0 %v20
  %v122 = vpop.f32.mrf.mxu0
  %v123 = vadd.f32 %v99, %v122
  %124 = vdwg.mxu0
  %125 = vmatpush.msra.mxu0 %v56
  %126 = vmatpush.msra.mxu0 %v55
  %127 = vmatpush.msra.mxu0 %v54
  %128 = vmatpush.msra.mxu0 %v53
  %129 = vmatpush.msra.mxu0 %v52
  %130 = vmatpush.msra.mxu0 %v51
  %131 = vmatpush.msra.mxu0 %v50
  %132 = vmatpush.msra.mxu0 %v49
  %133 = vmatpush.msra.mxu0 %v48
  %134 = vmatpush.msra.mxu0 %v47
  %135 = vmatpush.msra.mxu0 %v46
  %136 = vmatpush.msra.mxu0 %v45
  %137 = vmatpush.msra.mxu0 %v44
  %138 = vmatpush.msra.mxu0 %v43
  %139 = vmatpush.msra.mxu0 %v42
  %140 = vmatpush.msra.mxu0 %v41
  %141 = vmatmul.f32.gmra.mxu0 %v21
  %v142 = vpop.f32.mrf.mxu0
  %v143 = vadd.f32 %v123, %v142
  %144 = vdwg.mxu0
  %145 = vmatpush.msra.mxu0 %v72
  %146 = vmatpush.msra.mxu0 %v71
  %147 = vmatpush.msra.mxu0 %v70
  %148 = vmatpush.msra.mxu0 %v69
  %149 = vmatpush.msra.mxu0 %v68
  %150 = vmatpush.msra.mxu0 %v67
  %151 = vmatpush.msra.mxu0 %v66
  %152 = vmatpush.msra.mxu0 %v65
  %153 = vmatpush.msra.mxu0 %v64
  %154 = vmatpush.msra.mxu0 %v63
  %155 = vmatpush.msra.mxu0 %v62
  %156 = vmatpush.msra.mxu0 %v61
  %157 = vmatpush.msra.mxu0 %v60
  %158 = vmatpush.msra.mxu0 %v59
  %159 = vmatpush.msra.mxu0 %v58
  %160 = vmatpush.msra.mxu0 %v57
  %161 = vmatmul.f32.gmra.mxu0 %v22
  %v162 = vpop.f32.mrf.mxu0
  %v163 = vadd.f32 %v143, %v162
  %164 = vdwg.mxu0
  %165 = vmatpush.msra.mxu0 %v88
  %166 = vmatpush.msra.mxu0 %v87
  %167 = vmatpush.msra.mxu0 %v86
  %168 = vmatpush.msra.mxu0 %v85
  %169 = vmatpush.msra.mxu0 %v84
  %170 = vmatpush.msra.mxu0 %v83
  %171 = vmatpush.msra.mxu0 %v82
  %172 = vmatpush.msra.mxu0 %v81
  %173 = vmatpush.msra.mxu0 %v80
  %174 = vmatpush.msra.mxu0 %v79
  %175 = vmatpush.msra.mxu0 %v78
  %176 = vmatpush.msra.mxu0 %v77
  %177 = vmatpush.msra.mxu0 %v76
  %178 = vmatpush.msra.mxu0 %v75
  %179 = vmatpush.msra.mxu0 %v74
  %180 = vmatpush.msra.mxu0 %v73
  %181 = vmatmul.f32.gmra.mxu0 %v23
  %v182 = vpop.f32.mrf.mxu0
  %v183 = vadd.f32 %v163, %v182
  %184 = vdwg.mxu0
  %185 = vmatpush.msra.mxu0 0.0
  %186 = vmatpush.msra.mxu0 0.0
  %187 = vmatpush.msra.mxu0 0.0
  %188 = vmatpush.msra.mxu0 0.0
  %189 = vmatpush.msra.mxu0 0.0
  %190 = vmatpush.msra.mxu0 0.0
  %191 = vmatpush.msra.mxu0 0.0
  %192 = vmatpush.msra.mxu0 0.0
  %193 = vmatpush.msra.mxu0 %v96
  %194 = vmatpush.msra.mxu0 %v95
  %195 = vmatpush.msra.mxu0 %v94
  %196 = vmatpush.msra.mxu0 %v93
  %197 = vmatpush.msra.mxu0 %v92
  %198 = vmatpush.msra.mxu0 %v91
  %199 = vmatpush.msra.mxu0 %v90
  %200 = vmatpush.msra.mxu0 %v89
  %201 = vmatmul.f32.gmra.mxu0 %v103
  %v202 = vpop.f32.mrf.mxu0
  %v203 = vadd.f32 %v183, %v202
  %204 = vdwg.mxu0
  %v205 = vsel %vm101, %v203, 0.0
  %v206 = vrot.slane %v205, 4
  %v207 = vadd.f32 %v205, %v206
  %v208 = vrot.slane %v207, 2
  %v209 = vadd.f32 %v207, %v208
  %v210 = vrot.slane %v209, 1
  %v211 = vadd.f32 %v209, %v210
  %v212 = vrcp.pop 8.0
  %v213 = vmul.f32 8.0, %v212
  %v214 = vsub.f32 1.0, %v213
  %v215 = vmul.f32 %v212, %v214
  %v216 = vadd.f32 %v212, %v215
  %vm217 = vweird.f32 %v212
  %v218 = vsel %vm217, %v212, %v216
  %v219 = vmul.f32 %v211, %v218
  %v220 = vsub.f32 %v203, %v219
  %v221 = vmul.f32 %v220, %v220
  %v222 = vsel %vm101, %v221, 0.0
  %v223 = vrot.slane %v222, 4
  %v224 = vadd.f32 %v222, %v223
  %v225 = vrot.slane %v224, 2
  %v226 = vadd.f32 %v224, %v225
  %v227 = vrot.slane %v226, 1
  %v228 = vadd.f32 %v226, %v227
  %v229 = vmul.f32 %v228, %v218
  %v230 = vadd.f32 %v229, 1e-05
  %v231 = vrsqrt.pop %v230
  %v232 = vmul.f32 %v231, %v230
  %v233 = vmul.f32 %v232, %v231
  %v234 = vmul.f32 0.5, %v233
  %v235 = vsub.f32 1.5, %v234
  %v236 = vmul.f32 %v231, %v235
  %vm237 = vweird.f32 %v230
  %vm238 = vweird.f32 %v231
  %vm239 = vmor %vm237, %vm238
  %v240 = vsel %vm239, %v231, %v236
  %v241 = vld [vmem:[%s3] sm:$0x1]
  %v242 = vmul.f32 %v240, %v241
  %v243 = vperm.slane %v242, 0
  %v244 = vmul.f32 %v220, %v243
  %v245 = vld [vmem:[%s4] sm:$0x1]
  %v247 = vperm.slane %v245, 0
  %v249 = vadd.f32 %v244, %v247
  %v250 = vmax.f32 %v249, 0.0
  %251 = vst.msk [vmem:[%s5] sm:$0xff] %vm101, %v250
  // Predicated region
  $region22: #{_lambda_.7} parent=0 // pred_check
    _
  $region23: #{_lambda_.7} parent=0 // pred_check_branch
    %253 = sbr.rel (0) target = $region25
  $region24: #{_lambda_.7} parent=0 // pred_region
    _
  $region25: #{_lambda_.7} parent=0 // pred_fallthru
    _
  // Predicated region
  $region26: #{_lambda_.7} parent=0 // pred_check
    _
  $region27: #{_lambda_.7} parent=0 // pred_check_branch
    %255 = sbr.rel (0) target = $region29
  $region28: #{_lambda_.7} parent=0 // pred_region
    _
  $region29: #{_lambda_.7} parent=0 // pred_fallthru
    _

// kernel: _lambda_.6
$region0: #{_lambda_.6}
  #allocation0 [shape = 'u32[]', space=smem, size = 0x4, offset = 0x4, fixed_abs, tag = 'smem constant byte address 0x4 - core index']
  #allocation1 [shape = 'u32[72,128]{1,0:T(1,128)}', space=vmem, size = 0x9000, scoped, tag = 'internal scratch']
  %s0 = inlined_call_operand.vmem [shape: f32[32,576], index: 0, kind: input, shape index: {}]
  %s1 = inlined_call_operand.vmem [shape: f32[576,64], index: 1, kind: input, shape index: {}]
  %s2 = inlined_call_operand.vmem [shape: f32[1,64], index: 2, kind: input, shape index: {}]
  %s3 = inlined_call_operand.vmem [shape: f32[1,64], index: 3, kind: input, shape index: {}]
  %s4 = inlined_call_operand.vmem [shape: f32[1,64], index: 4, kind: input, shape index: {}]
  %s5 = inlined_call_operand.vmem [shape: f32[32,64], index: 5, kind: output, shape index: {}]
  %s6 = sld [smem:[#allocation0]]
  $region30: #{_lambda_.6} parent=0
    _
  %s8 = ssub.s32 1, %s6
  %s9 = scalar_select 0, %s8, %s6
  // Predicated region
  $region2: #{_lambda_.6} parent=0 // pred_check
    _
  $region3: #{_lambda_.6} parent=0 // pred_check_branch
    %11 = sbr.rel (0) target = $region5
  $region4: #{_lambda_.6} parent=0 // pred_region
    _
  $region5: #{_lambda_.6} parent=0 // pred_fallthru
    _
  // Predicated region
  $region6: #{_lambda_.6} parent=0 // pred_check
    _
  $region7: #{_lambda_.6} parent=0 // pred_check_branch
    %13 = sbr.rel (0) target = $region9
  $region8: #{_lambda_.6} parent=0 // pred_region
    _
  $region9: #{_lambda_.6} parent=0 // pred_fallthru
    _
  // Predicated region
  $region10: #{_lambda_.6} parent=0 // pred_check
    _
  $region11: #{_lambda_.6} parent=0 // pred_check_branch
    %15 = sbr.rel (0) target = $region13
  $region12: #{_lambda_.6} parent=0 // pred_region
    _
  $region13: #{_lambda_.6} parent=0 // pred_fallthru
    _
  // Predicated region
  $region14: #{_lambda_.6} parent=0 // pred_check
    _
  $region15: #{_lambda_.6} parent=0 // pred_check_branch
    %17 = sbr.rel (0) target = $region17
  $region16: #{_lambda_.6} parent=0 // pred_region
    _
  $region17: #{_lambda_.6} parent=0 // pred_fallthru
    _
  // Predicated region
  $region18: #{_lambda_.6} parent=0 // pred_check
    _
  $region19: #{_lambda_.6} parent=0 // pred_check_branch
    %19 = sbr.rel (0) target = $region21
  $region20: #{_lambda_.6} parent=0 // pred_region
    _
  $region21: #{_lambda_.6} parent=0 // pred_fallthru
    _
  %v20 = vld [vmem:[%s0] sm:$0xff]
  %v21 = vld [vmem:[%s0 + $0x8] sm:$0xff]
  %v22 = vld [vmem:[%s0 + $0x10] sm:$0xff]
  %v23 = vld [vmem:[%s0 + $0x18] sm:$0xff]
  %v24 = vld [vmem:[%s0 + $0x20] sm:$0xff]
  %v25 = vld [vmem:[%s0 + $0x28] sm:$0xff]
  %v26 = vld [vmem:[%s0 + $0x30] sm:$0xff]
  %v27 = vld [vmem:[%s0 + $0x38] sm:$0xff]
  %v28 = vld [vmem:[%s0 + $0x40] sm:$0xff]
  %v29 = vld [vmem:[%s0 + $0x48] sm:$0xff]
  %v30 = vld [vmem:[%s0 + $0x50] sm:$0xff]
  %v31 = vld [vmem:[%s0 + $0x58] sm:$0xff]
  %v32 = vld [vmem:[%s0 + $0x60] sm:$0xff]
  %v33 = vld [vmem:[%s0 + $0x68] sm:$0xff]
  %v34 = vld [vmem:[%s0 + $0x70] sm:$0xff]
  %v35 = vld [vmem:[%s0 + $0x78] sm:$0xff]
  %v36 = vld [vmem:[%s0 + $0x80] sm:$0xff]
  %v37 = vld [vmem:[%s0 + $0x88] sm:$0xff]
  %v38 = vld [vmem:[%s0 + $0x90] sm:$0xff]
  %v39 = vld [vmem:[%s0 + $0x98] sm:$0xff]
  %v40 = vld [vmem:[%s1] sm:$0xff]
  %v41 = vld [vmem:[%s1 + $0x8] sm:$0xff]
  %v42 = vld [vmem:[%s1 + $0x10] sm:$0xff]
  %v43 = vld [vmem:[%s1 + $0x18] sm:$0xff]
  %v44 = vld [vmem:[%s1 + $0x20] sm:$0xff]
  %v45 = vld [vmem:[%s1 + $0x28] sm:$0xff]
  %v46 = vld [vmem:[%s1 + $0x30] sm:$0xff]
  %v47 = vld [vmem:[%s1 + $0x38] sm:$0xff]
  %v48 = vld [vmem:[%s1 + $0x40] sm:$0xff]
  %v49 = vld [vmem:[%s1 + $0x48] sm:$0xff]
  %v50 = vld [vmem:[%s1 + $0x50] sm:$0xff]
  %v51 = vld [vmem:[%s1 + $0x58] sm:$0xff]
  %v52 = vld [vmem:[%s1 + $0x60] sm:$0xff]
  %v53 = vld [vmem:[%s1 + $0x68] sm:$0xff]
  %v54 = vld [vmem:[%s1 + $0x70] sm:$0xff]
  %v55 = vld [vmem:[%s1 + $0x78] sm:$0xff]
  %v56 = vld [vmem:[%s1 + $0x80] sm:$0xff]
  %v57 = vld [vmem:[%s1 + $0x88] sm:$0xff]
  %v58 = vld [vmem:[%s1 + $0x90] sm:$0xff]
  %v59 = vld [vmem:[%s1 + $0x98] sm:$0xff]
  %v60 = vld [vmem:[%s1 + $0xa0] sm:$0xff]
  %v61 = vld [vmem:[%s1 + $0xa8] sm:$0xff]
  %v62 = vld [vmem:[%s1 + $0xb0] sm:$0xff]
  %v63 = vld [vmem:[%s1 + $0xb8] sm:$0xff]
  %v64 = vld [vmem:[%s1 + $0xc0] sm:$0xff]
  %v65 = vld [vmem:[%s1 + $0xc8] sm:$0xff]
  %v66 = vld [vmem:[%s1 + $0xd0] sm:$0xff]
  %v67 = vld [vmem:[%s1 + $0xd8] sm:$0xff]
  %v68 = vld [vmem:[%s1 + $0xe0] sm:$0xff]
  %v69 = vld [vmem:[%s1 + $0xe8] sm:$0xff]
  %v70 = vld [vmem:[%s1 + $0xf0] sm:$0xff]
  %v71 = vld [vmem:[%s1 + $0xf8] sm:$0xff]
  %v72 = vld [vmem:[%s1 + $0x100] sm:$0xff]
  %v73 = vld [vmem:[%s1 + $0x108] sm:$0xff]
  %v74 = vld [vmem:[%s1 + $0x110] sm:$0xff]
  %v75 = vld [vmem:[%s1 + $0x118] sm:$0xff]
  %v76 = vld [vmem:[%s1 + $0x120] sm:$0xff]
  %v77 = vld [vmem:[%s1 + $0x128] sm:$0xff]
  %v78 = vld [vmem:[%s1 + $0x130] sm:$0xff]
  %v79 = vld [vmem:[%s1 + $0x138] sm:$0xff]
  %v80 = vld [vmem:[%s1 + $0x140] sm:$0xff]
  %v81 = vld [vmem:[%s1 + $0x148] sm:$0xff]
  %v82 = vld [vmem:[%s1 + $0x150] sm:$0xff]
  %v83 = vld [vmem:[%s1 + $0x158] sm:$0xff]
  %v84 = vld [vmem:[%s1 + $0x160] sm:$0xff]
  %v85 = vld [vmem:[%s1 + $0x168] sm:$0xff]
  %v86 = vld [vmem:[%s1 + $0x170] sm:$0xff]
  %v87 = vld [vmem:[%s1 + $0x178] sm:$0xff]
  %v88 = vld [vmem:[%s1 + $0x180] sm:$0xff]
  %v89 = vld [vmem:[%s1 + $0x188] sm:$0xff]
  %v90 = vld [vmem:[%s1 + $0x190] sm:$0xff]
  %v91 = vld [vmem:[%s1 + $0x198] sm:$0xff]
  %v92 = vld [vmem:[%s1 + $0x1a0] sm:$0xff]
  %v93 = vld [vmem:[%s1 + $0x1a8] sm:$0xff]
  %v94 = vld [vmem:[%s1 + $0x1b0] sm:$0xff]
  %v95 = vld [vmem:[%s1 + $0x1b8] sm:$0xff]
  %v96 = vld [vmem:[%s1 + $0x1c0] sm:$0xff]
  %v97 = vld [vmem:[%s1 + $0x1c8] sm:$0xff]
  %v98 = vld [vmem:[%s1 + $0x1d0] sm:$0xff]
  %v99 = vld [vmem:[%s1 + $0x1d8] sm:$0xff]
  %v100 = vld [vmem:[%s1 + $0x1e0] sm:$0xff]
  %v101 = vld [vmem:[%s1 + $0x1e8] sm:$0xff]
  %v102 = vld [vmem:[%s1 + $0x1f0] sm:$0xff]
  %v103 = vld [vmem:[%s1 + $0x1f8] sm:$0xff]
  %v104 = vld [vmem:[%s1 + $0x200] sm:$0xff]
  %v105 = vld [vmem:[%s1 + $0x208] sm:$0xff]
  %v106 = vld [vmem:[%s1 + $0x210] sm:$0xff]
  %v107 = vld [vmem:[%s1 + $0x218] sm:$0xff]
  %v108 = vld [vmem:[%s1 + $0x220] sm:$0xff]
  %v109 = vld [vmem:[%s1 + $0x228] sm:$0xff]
  %v110 = vld [vmem:[%s1 + $0x230] sm:$0xff]
  %v111 = vld [vmem:[%s1 + $0x238] sm:$0xff]
  %v112 = vld [vmem:[%s2] sm:$0x1]
  %v114 = vperm.slane %v112, 0
  %vm116 = vcmask 523264
  %v118 = vsel %vm116, %v24, 0
  %v121 = vsel %vm116, %v29, 0
  %v124 = vsel %vm116, %v34, 0
  %v127 = vsel %vm116, %v39, 0
  %129 = vmatpush.msra.mxu0 %v55
  %130 = vmatpush.msra.mxu0 %v54
  %131 = vmatpush.msra.mxu0 %v53
  %132 = vmatpush.msra.mxu0 %v52
  %133 = vmatpush.msra.mxu0 %v51
  %134 = vmatpush.msra.mxu0 %v50
  %135 = vmatpush.msra.mxu0 %v49
  %136 = vmatpush.msra.mxu0 %v48
  %137 = vmatpush.msra.mxu0 %v47
  %138 = vmatpush.msra.mxu0 %v46
  %139 = vmatpush.msra.mxu0 %v45
  %140 = vmatpush.msra.mxu0 %v44
  %141 = vmatpush.msra.mxu0 %v43
  %142 = vmatpush.msra.mxu0 %v42
  %143 = vmatpush.msra.mxu0 %v41
  %144 = vmatpush.msra.mxu0 %v40
  %145 = vmatmul.f32.gmra.mxu0 %v20
  %v146 = vpop.f32.mrf.mxu0
  %v147 = vadd.f32 %v114, %v146
  %148 = vmatmul.f32.gmra.mxu0 %v25
  %v149 = vpop.f32.mrf.mxu0
  %v150 = vadd.f32 %v114, %v149
  %151 = vmatmul.f32.gmra.mxu0 %v30
  %v152 = vpop.f32.mrf.mxu0
  %v153 = vadd.f32 %v114, %v152
  %154 = vmatmul.f32.gmra.mxu0 %v35
  %v155 = vpop.f32.mrf.mxu0
  %v156 = vadd.f32 %v114, %v155
  %157 = vdwg.mxu0
  %158 = vmatpush.msra.mxu0 %v71
  %159 = vmatpush.msra.mxu0 %v70
  %160 = vmatpush.msra.mxu0 %v69
  %161 = vmatpush.msra.mxu0 %v68
  %162 = vmatpush.msra.mxu0 %v67
  %163 = vmatpush.msra.mxu0 %v66
  %164 = vmatpush.msra.mxu0 %v65
  %165 = vmatpush.msra.mxu0 %v64
  %166 = vmatpush.msra.mxu0 %v63
  %167 = vmatpush.msra.mxu0 %v62
  %168 = vmatpush.msra.mxu0 %v61
  %169 = vmatpush.msra.mxu0 %v60
  %170 = vmatpush.msra.mxu0 %v59
  %171 = vmatpush.msra.mxu0 %v58
  %172 = vmatpush.msra.mxu0 %v57
  %173 = vmatpush.msra.mxu0 %v56
  %174 = vmatmul.f32.gmra.mxu0 %v21
  %v175 = vpop.f32.mrf.mxu0
  %v176 = vadd.f32 %v147, %v175
  %177 = vmatmul.f32.gmra.mxu0 %v26
  %v178 = vpop.f32.mrf.mxu0
  %v179 = vadd.f32 %v150, %v178
  %180 = vmatmul.f32.gmra.mxu0 %v31
  %v181 = vpop.f32.mrf.mxu0
  %v182 = vadd.f32 %v153, %v181
  %183 = vmatmul.f32.gmra.mxu0 %v36
  %v184 = vpop.f32.mrf.mxu0
  %v185 = vadd.f32 %v156, %v184
  %186 = vdwg.mxu0
  %187 = vmatpush.msra.mxu0 %v87
  %188 = vmatpush.msra.mxu0 %v86
  %189 = vmatpush.msra.mxu0 %v85
  %190 = vmatpush.msra.mxu0 %v84
  %191 = vmatpush.msra.mxu0 %v83
  %192 = vmatpush.msra.mxu0 %v82
  %193 = vmatpush.msra.mxu0 %v81
  %194 = vmatpush.msra.mxu0 %v80
  %195 = vmatpush.msra.mxu0 %v79
  %196 = vmatpush.msra.mxu0 %v78
  %197 = vmatpush.msra.mxu0 %v77
  %198 = vmatpush.msra.mxu0 %v76
  %199 = vmatpush.msra.mxu0 %v75
  %200 = vmatpush.msra.mxu0 %v74
  %201 = vmatpush.msra.mxu0 %v73
  %202 = vmatpush.msra.mxu0 %v72
  %203 = vmatmul.f32.gmra.mxu0 %v22
  %v204 = vpop.f32.mrf.mxu0
  %v205 = vadd.f32 %v176, %v204
  %206 = vmatmul.f32.gmra.mxu0 %v27
  %v207 = vpop.f32.mrf.mxu0
  %v208 = vadd.f32 %v179, %v207
  %209 = vmatmul.f32.gmra.mxu0 %v32
  %v210 = vpop.f32.mrf.mxu0
  %v211 = vadd.f32 %v182, %v210
  %212 = vmatmul.f32.gmra.mxu0 %v37
  %v213 = vpop.f32.mrf.mxu0
  %v214 = vadd.f32 %v185, %v213
  %215 = vdwg.mxu0
  %216 = vmatpush.msra.mxu0 %v103
  %217 = vmatpush.msra.mxu0 %v102
  %218 = vmatpush.msra.mxu0 %v101
  %219 = vmatpush.msra.mxu0 %v100
  %220 = vmatpush.msra.mxu0 %v99
  %221 = vmatpush.msra.mxu0 %v98
  %222 = vmatpush.msra.mxu0 %v97
  %223 = vmatpush.msra.mxu0 %v96
  %224 = vmatpush.msra.mxu0 %v95
  %225 = vmatpush.msra.mxu0 %v94
  %226 = vmatpush.msra.mxu0 %v93
  %227 = vmatpush.msra.mxu0 %v92
  %228 = vmatpush.msra.mxu0 %v91
  %229 = vmatpush.msra.mxu0 %v90
  %230 = vmatpush.msra.mxu0 %v89
  %231 = vmatpush.msra.mxu0 %v88
  %232 = vmatmul.f32.gmra.mxu0 %v23
  %v233 = vpop.f32.mrf.mxu0
  %v234 = vadd.f32 %v205, %v233
  %235 = vmatmul.f32.gmra.mxu0 %v28
  %v236 = vpop.f32.mrf.mxu0
  %v237 = vadd.f32 %v208, %v236
  %238 = vmatmul.f32.gmra.mxu0 %v33
  %v239 = vpop.f32.mrf.mxu0
  %v240 = vadd.f32 %v211, %v239
  %241 = vmatmul.f32.gmra.mxu0 %v38
  %v242 = vpop.f32.mrf.mxu0
  %v243 = vadd.f32 %v214, %v242
  %244 = vdwg.mxu0
  %245 = vmatpush.msra.mxu0 0.0
  %246 = vmatpush.msra.mxu0 0.0
  %247 = vmatpush.msra.mxu0 0.0
  %248 = vmatpush.msra.mxu0 0.0
  %249 = vmatpush.msra.mxu0 0.0
  %250 = vmatpush.msra.mxu0 0.0
  %251 = vmatpush.msra.mxu0 0.0
  %252 = vmatpush.msra.mxu0 0.0
  %253 = vmatpush.msra.mxu0 %v111
  %254 = vmatpush.msra.mxu0 %v110
  %255 = vmatpush.msra.mxu0 %v109
  %256 = vmatpush.msra.mxu0 %v108
  %257 = vmatpush.msra.mxu0 %v107
  %258 = vmatpush.msra.mxu0 %v106
  %259 = vmatpush.msra.mxu0 %v105
  %260 = vmatpush.msra.mxu0 %v104
  %261 = vmatmul.f32.gmra.mxu0 %v118
  %v262 = vpop.f32.mrf.mxu0
  %v263 = vadd.f32 %v234, %v262
  %264 = vmatmul.f32.gmra.mxu0 %v121
  %v265 = vpop.f32.mrf.mxu0
  %v266 = vadd.f32 %v237, %v265
  %267 = vmatmul.f32.gmra.mxu0 %v124
  %v268 = vpop.f32.mrf.mxu0
  %v269 = vadd.f32 %v240, %v268
  %270 = vmatmul.f32.gmra.mxu0 %v127
  %v271 = vpop.f32.mrf.mxu0
  %v272 = vadd.f32 %v243, %v271
  %273 = vdwg.mxu0
  %v274 = vsel %vm116, %v263, 0.0
  %v275 = vsel %vm116, %v266, 0.0
  %v276 = vadd.f32 %v274, %v275
  %v277 = vsel %vm116, %v269, 0.0
  %v278 = vadd.f32 %v276, %v277
  %v279 = vsel %vm116, %v272, 0.0
  %v280 = vadd.f32 %v278, %v279
  %v281 = vrot.slane %v280, 4
  %v282 = vadd.f32 %v280, %v281
  %v283 = vrot.slane %v282, 2
  %v284 = vadd.f32 %v282, %v283
  %v285 = vrot.slane %v284, 1
  %v286 = vadd.f32 %v284, %v285
  %v287 = vrcp.pop 32.0
  %v288 = vmul.f32 32.0, %v287
  %v289 = vsub.f32 1.0, %v288
  %v290 = vmul.f32 %v287, %v289
  %v291 = vadd.f32 %v287, %v290
  %vm292 = vweird.f32 %v287
  %v293 = vsel %vm292, %v287, %v291
  %v294 = vmul.f32 %v286, %v293
  %v295 = vsub.f32 %v263, %v294
  %v296 = vsub.f32 %v266, %v294
  %v297 = vsub.f32 %v269, %v294
  %v298 = vsub.f32 %v272, %v294
  %v299 = vmul.f32 %v295, %v295
  %v300 = vmul.f32 %v296, %v296
  %v301 = vmul.f32 %v297, %v297
  %v302 = vmul.f32 %v298, %v298
  %v303 = vsel %vm116, %v299, 0.0
  %v304 = vsel %vm116, %v300, 0.0
  %v305 = vadd.f32 %v303, %v304
  %v306 = vsel %vm116, %v301, 0.0
  %v307 = vadd.f32 %v305, %v306
  %v308 = vsel %vm116, %v302, 0.0
  %v309 = vadd.f32 %v307, %v308
  %v310 = vrot.slane %v309, 4
  %v311 = vadd.f32 %v309, %v310
  %v312 = vrot.slane %v311, 2
  %v313 = vadd.f32 %v311, %v312
  %v314 = vrot.slane %v313, 1
  %v315 = vadd.f32 %v313, %v314
  %v316 = vmul.f32 %v315, %v293
  %v317 = vadd.f32 %v316, 1e-05
  %v318 = vrsqrt.pop %v317
  %v319 = vmul.f32 %v318, %v317
  %v320 = vmul.f32 %v319, %v318
  %v321 = vmul.f32 0.5, %v320
  %v322 = vsub.f32 1.5, %v321
  %v323 = vmul.f32 %v318, %v322
  %vm324 = vweird.f32 %v317
  %vm325 = vweird.f32 %v318
  %vm326 = vmor %vm324, %vm325
  %v327 = vsel %vm326, %v318, %v323
  %v328 = vld [vmem:[%s3] sm:$0x1]
  %v329 = vmul.f32 %v327, %v328
  %v330 = vperm.slane %v329, 0
  %v331 = vmul.f32 %v295, %v330
  %v332 = vmul.f32 %v296, %v330
  %v333 = vmul.f32 %v297, %v330
  %v334 = vmul.f32 %v298, %v330
  %v335 = vld [vmem:[%s4] sm:$0x1]
  %v337 = vperm.slane %v335, 0
  %v339 = vadd.f32 %v331, %v337
  %v340 = vadd.f32 %v332, %v337
  %v341 = vadd.f32 %v333, %v337
  %v342 = vadd.f32 %v334, %v337
  %v343 = vmax.f32 %v339, 0.0
  %v344 = vmax.f32 %v340, 0.0
  %v345 = vmax.f32 %v341, 0.0
  %v346 = vmax.f32 %v342, 0.0
  %347 = vst.msk [vmem:[%s5] sm:$0xff] %vm116, %v343
  %348 = vst.msk [vmem:[%s5 + $0x8] sm:$0xff] %vm116, %v344
  %349 = vst.msk [vmem:[%s5 + $0x10] sm:$0xff] %vm116, %v345
  %350 = vst.msk [vmem:[%s5 + $0x18] sm:$0xff] %vm116, %v346
  // Predicated region
  $region22: #{_lambda_.6} parent=0 // pred_check
    _
  $region23: #{_lambda_.6} parent=0 // pred_check_branch
    %352 = sbr.rel (0) target = $region25
  $region24: #{_lambda_.6} parent=0 // pred_region
    _
  $region25: #{_lambda_.6} parent=0 // pred_fallthru
    _
  // Predicated region
  $region26: #{_lambda_.6} parent=0 // pred_check
    _
  $region27: #{_lambda_.6} parent=0 // pred_check_branch
    %354 = sbr.rel (0) target = $region29
  $region28: #{_lambda_.6} parent=0 // pred_region
    _
  $region29: #{_lambda_.6} parent=0 // pred_fallthru
    _

</llo_original>
